<compile_context>
chip_gen: v5e
topology: v5e:2x2
jax: 0.10.0
libtpu: 0.0.40
codegen_flags: <defaults>
</compile_context>

<pallas_src>
import math
from functools import partial

import jax
import jax.numpy as jnp
from jax.experimental import pallas as pl
from jax.experimental.pallas import tpu as pltpu


# -----------------------------------------------------------------------------
# Fused kernel: grid = (batch_block_idx, layer_idx).  All L layers for a batch
# block run back-to-back with the residual stream resident in VMEM scratch.
# -----------------------------------------------------------------------------
def fused_decoder_kernel(
    q_ref, kv_ref,                               # activations (Bb, S, E)
    qw_ref, qb_ref,                              # q projection (scale folded in)
    kvw_ref, kvb_ref,                            # fused k|v projection (E, 2E)
    ln1w_ref, ln1b_ref,                          # layer norm 1
    fc1w_ref, fc1b_ref,                          # FFN linear 1
    fc2w_ref, fc2b_ref,                          # FFN linear 2
    ln2w_ref, ln2b_ref,                          # layer norm 2
    o_ref,                                       # output (Bb, S, E)
    x_scratch, kv_cast, attn_scratch,            # VMEM scratch
    *, head_num: int,
):
    layer = pl.program_id(1)
    n_layers = pl.num_programs(1)
    Bb, S, E = q_ref.shape
    H = head_num
    Dh = E // H
    M = Bb * S
    mm_dtype = qw_ref.dtype                      # matmul-operand dtype (bf16 or f32)

    # Layer 0 for this batch block: load the resident residual stream and the
    # layer-invariant KV embeddings (cast once for the MXU).
    @pl.when(layer == 0)
    def _():
        x_scratch[...] = q_ref[...].reshape(M, E).astype(jnp.float32)
        kv_cast[...] = kv_ref[...].reshape(M, E).astype(mm_dtype)

    x2d = x_scratch[...]                         # (M, E) f32 residual stream
    x_mm = x2d.astype(mm_dtype)
    kv_mm = kv_cast[...]

    # --- q and fused k|v projections (MXU, M = Bb*S rows, f32 accumulation) ---
    # 1/sqrt(Dh) is already folded into qw/qb by the wrapper.
    q = jnp.dot(x_mm, qw_ref[0], preferred_element_type=jnp.float32) + qb_ref[0]
    kv = jnp.dot(kv_mm, kvw_ref[0], preferred_element_type=jnp.float32) + kvb_ref[0]

    q3 = q.reshape(Bb, S, E)
    k3 = kv[:, :E].reshape(Bb, S, E).astype(mm_dtype)
    v3 = kv[:, E:].reshape(Bb, S, E).astype(mm_dtype)

    # --- multi-head attention: heads are contiguous lane slices; each head is
    #     a batched (over Bb) matmul pair; outputs written straight into a VMEM
    #     scratch slice (no concatenate, no transposes). -----------------------
    for h in range(H):                           # H static -> unrolled
        sl = slice(h * Dh, (h + 1) * Dh)
        qh = q3[:, :, sl].astype(mm_dtype)       # (Bb, S, Dh)
        kh = k3[:, :, sl]
        vh = v3[:, :, sl]
        s = jnp.einsum("bqd,bkd->bqk", qh, kh,
                       preferred_element_type=jnp.float32)       # (Bb, S, S)
        s = s - jnp.max(s, axis=-1, keepdims=True)
        p = jnp.exp(s)
        p = p * pl.reciprocal(jnp.sum(p, axis=-1, keepdims=True), approx=True)
        attn_scratch[:, :, sl] = jnp.einsum(
            "bqk,bkd->bqd", p.astype(mm_dtype), vh,
            preferred_element_type=jnp.float32)                  # (Bb, S, Dh)

    attn2d = attn_scratch[...].reshape(M, E)

    def layer_norm(z, w, b):
        mu = jnp.mean(z, axis=-1, keepdims=True)
        var = jnp.mean((z - mu) ** 2, axis=-1, keepdims=True)
        return (z - mu) * jax.lax.rsqrt(var + 1e-5) * w + b

    # --- residual + LN1 -------------------------------------------------------
    h1 = layer_norm(attn2d + x2d, ln1w_ref[0], ln1b_ref[0])

    # --- FFN ------------------------------------------------------------------
    f = jnp.dot(h1.astype(mm_dtype), fc1w_ref[0],
                preferred_element_type=jnp.float32) + fc1b_ref[0]
    f = jnp.maximum(f, 0.0)
    f = jnp.dot(f.astype(mm_dtype), fc2w_ref[0],
                preferred_element_type=jnp.float32) + fc2b_ref[0]

    # --- residual + LN2 -------------------------------------------------------
    h2 = layer_norm(h1 + f, ln2w_ref[0], ln2b_ref[0])

    x_scratch[...] = h2                          # stays resident for next layer

    @pl.when(layer == n_layers - 1)
    def _():
        o_ref[...] = h2.reshape(Bb, S, E).astype(o_ref.dtype)


# -----------------------------------------------------------------------------
# Wrapper: stack per-layer weights along a leading L axis and launch ONE kernel.
# -----------------------------------------------------------------------------
def decoder_pallas(q_emb, kv_emb, layer_params, head_num, *,
                   batch_block=None, matmul_dtype=jnp.bfloat16):
    B, S, E = q_emb.shape
    L = len(layer_params)
    F = layer_params[0]["fc1_w"].shape[-1]
    Dh = E // head_num
    inv_scale = 1.0 / math.sqrt(Dh)

    if batch_block is None:
        batch_block = B                          # whole batch per grid step
    assert B % batch_block == 0
    nb = B // batch_block

    stack = lambda name: jnp.stack([p[name] for p in layer_params])

    # Fold 1/sqrt(Dh) into the q projection (mathematically exact) and cast the
    # matmul weights; biases / LN params stay f32 (VPU adds, not MXU operands).
    qw = (stack("q_w") * inv_scale).astype(matmul_dtype)             # (L, E, E)
    qb = stack("q_b") * inv_scale                                    # (L, 1, E)
    kvw = jnp.concatenate([stack("k_w"), stack("v_w")],
                          axis=-1).astype(matmul_dtype)              # (L, E, 2E)
    kvb = jnp.concatenate([stack("k_b"), stack("v_b")], axis=-1)     # (L, 1, 2E)
    ln1w, ln1b = stack("ln1_w"), stack("ln1_b")
    fc1w = stack("fc1_w").astype(matmul_dtype)
    fc1b = stack("fc1_b")
    fc2w = stack("fc2_w").astype(matmul_dtype)
    fc2b = stack("fc2_b")
    ln2w, ln2b = stack("ln2_w"), stack("ln2_b")

    act_spec = pl.BlockSpec((batch_block, S, E), lambda b, l: (b, 0, 0))
    wspec = lambda shp: pl.BlockSpec((1,) + shp, lambda b, l: (l, 0, 0))

    in_specs = [
        act_spec, act_spec,                      # q_embeddings, kv_embeddings
        wspec((E, E)), wspec((1, E)),            # q projection
        wspec((E, 2 * E)), wspec((1, 2 * E)),    # fused k|v projection
        wspec((1, E)), wspec((1, E)),            # layer norm 1
        wspec((E, F)), wspec((1, F)),            # FFN linear 1
        wspec((F, E)), wspec((1, E)),            # FFN linear 2
        wspec((1, E)), wspec((1, E)),            # layer norm 2
    ]

    return pl.pallas_call(
        partial(fused_decoder_kernel, head_num=head_num),
        out_shape=jax.ShapeDtypeStruct((B, S, E), jnp.float32),
        grid_spec=pltpu.PrefetchScalarGridSpec(
            num_scalar_prefetch=0,
            grid=(nb, L),                        # batch blocks x layers
            in_specs=in_specs,
            out_specs=act_spec,                  # same block across layer axis
            scratch_shapes=[
                pltpu.VMEM((batch_block * S, E), jnp.float32),    # residual x
                pltpu.VMEM((batch_block * S, E), matmul_dtype),   # cached kv
                pltpu.VMEM((batch_block, S, E), jnp.float32),     # attn output
            ],
        ),
        compiler_params=pltpu.CompilerParams(
            dimension_semantics=("parallel", "arbitrary"),
            vmem_limit_bytes=32 * 1024 * 1024,
        ),
    )(q_emb, kv_emb, qw, qb, kvw, kvb,
      ln1w, ln1b, fc1w, fc1b, fc2w, fc2b, ln2w, ln2b)


# -----------------------------------------------------------------------------
# Deterministic parameter init (PyTorch Linear init; LN = 1/0).  The interleave
# permutation (channel c -> head c % H, dim c // H) is folded into the q/k/v
# projection weight columns so channels are head-major inside the kernel.
# -----------------------------------------------------------------------------
def init_layer_params(key, embed_dim, head_num):
    perm = jnp.array(
        [d * head_num + h for h in range(head_num)
         for d in range(embed_dim // head_num)],
        dtype=jnp.int32,
    )

    def linear(key, fan_in, fan_out):
        kw, kb = jax.random.split(key)
        bound = 1.0 / math.sqrt(fan_in)
        w = jax.random.uniform(kw, (fan_in, fan_out), jnp.float32, -bound, bound)
        b = jax.random.uniform(kb, (fan_out,), jnp.float32, -bound, bound)
        return w, b

    k1, k2, k3, k4 = jax.random.split(key, 4)
    qw, qb = linear(k1, embed_dim, embed_dim)
    kvw, kvb = linear(k2, embed_dim, 2 * embed_dim)
    fc1w, fc1b = linear(k3, embed_dim, embed_dim)
    fc2w, fc2b = linear(k4, embed_dim, embed_dim)

    kw_, kb_ = kvw[:, :embed_dim], kvb[:embed_dim]
    vw_, vb_ = kvw[:, embed_dim:], kvb[embed_dim:]

    return {
        "q_w": qw[:, perm], "q_b": qb[perm].reshape(1, -1),
        "k_w": kw_[:, perm], "k_b": kb_[perm].reshape(1, -1),
        "v_w": vw_[:, perm], "v_b": vb_[perm].reshape(1, -1),
        "ln1_w": jnp.ones((1, embed_dim), jnp.float32),
        "ln1_b": jnp.zeros((1, embed_dim), jnp.float32),
        "fc1_w": fc1w, "fc1_b": fc1b.reshape(1, -1),
        "fc2_w": fc2w, "fc2_b": fc2b.reshape(1, -1),
        "ln2_w": jnp.ones((1, embed_dim), jnp.float32),
        "ln2_b": jnp.zeros((1, embed_dim), jnp.float32),
    }


# -----------------------------------------------------------------------------
# Pure-JAX f32 reference (exact PyTorch semantics; weights already head-major).
# -----------------------------------------------------------------------------
def decoder_ref(q_emb, kv_emb, layer_params, head_num):
    def layer_norm(z, w, b):
        mu = jnp.mean(z, axis=-1, keepdims=True)
        var = jnp.mean((z - mu) ** 2, axis=-1, keepdims=True)
        return (z - mu) / jnp.sqrt(var + 1e-5) * w[0] + b[0]

    x = q_emb
    for p in layer_params:
        B, S, E = x.shape
        Dh = E // head_num
        q = x @ p["q_w"] + p["q_b"][0]
        k = kv_emb @ p["k_w"] + p["k_b"][0]
        v = kv_emb @ p["v_w"] + p["v_b"][0]
        mq = q.reshape(B, S, head_num, Dh).transpose(0, 2, 1, 3)
        mk = k.reshape(B, S, head_num, Dh).transpose(0, 2, 1, 3)
        mv = v.reshape(B, S, head_num, Dh).transpose(0, 2, 1, 3)
        s = jnp.einsum("bhqd,bhkd->bhqk", mq, mk) / math.sqrt(Dh)
        s = jax.nn.softmax(s, axis=-1)
        o = jnp.einsum("bhqk,bhkv->bhqv", s, mv)
        attn = o.transpose(0, 2, 1, 3).reshape(B, S, E)
        h1 = layer_norm(attn + x, p["ln1_w"], p["ln1_b"])
        f = jnp.maximum(h1 @ p["fc1_w"] + p["fc1_b"][0], 0.0)
        f = f @ p["fc2_w"] + p["fc2_b"][0]
        x = layer_norm(h1 + f, p["ln2_w"], p["ln2_b"])
    return x


if __name__ == "__main__":
    # Small shapes consistent with the module: batch=2, seq=8, embed=32,
    # heads=4, layers=2.  kv_embeddings matches the q shape.
    B, S, E, H, L = 2, 8, 32, 4, 2

    key = jax.random.PRNGKey(0)
    k_q, k_kv, k_p = jax.random.split(key, 3)
    q_embeddings = jax.random.normal(k_q, (B, S, E), jnp.float32)
    kv_embeddings = jax.random.normal(k_kv, (B, S, E), jnp.float32)

    layer_keys = jax.random.split(k_p, L)
    layer_params = [init_layer_params(k, E, H) for k in layer_keys]

    ref = decoder_ref(q_embeddings, kv_embeddings, layer_params, H)

    # f32-MXU path: matches the f32 reference tightly (only the EUP approximate
    # reciprocal in the softmax normalization differs).
    out_f32 = jax.block_until_ready(
        decoder_pallas(q_embeddings, kv_embeddings, layer_params, H,
                       matmul_dtype=jnp.float32))
    assert out_f32.shape == (B, S, E)
    assert jnp.allclose(out_f32, ref, atol=5e-3, rtol=5e-3), "f32 path mismatch"

    # bf16-MXU fast path (f32 accumulation): MXU inputs rounded to bf16, so the
    # tolerance is loosened accordingly; structural bugs would be O(1) off.
    out_bf16 = jax.block_until_ready(
        decoder_pallas(q_embeddings, kv_embeddings, layer_params, H,
                       matmul_dtype=jnp.bfloat16))
    assert out_bf16.shape == (B, S, E)
    assert jnp.allclose(out_bf16, ref, atol=5e-2, rtol=5e-2), "bf16 path mismatch"

    print("KERNEL_OK")
</pallas_src>

<mosaic_0001>
module attributes {stable_mosaic.version = 11 : i64} {
  func.func @fused_decoder_kernel(%arg0: i32, %arg1: i32, %arg2: memref<2x8x32xf32, #tpu.memory_space<vmem>>, %arg3: memref<2x8x32xf32, #tpu.memory_space<vmem>>, %arg4: memref<1x32x32xf32, #tpu.memory_space<vmem>>, %arg5: memref<1x1x32xf32, #tpu.memory_space<vmem>>, %arg6: memref<1x32x64xf32, #tpu.memory_space<vmem>>, %arg7: memref<1x1x64xf32, #tpu.memory_space<vmem>>, %arg8: memref<1x1x32xf32, #tpu.memory_space<vmem>>, %arg9: memref<1x1x32xf32, #tpu.memory_space<vmem>>, %arg10: memref<1x32x32xf32, #tpu.memory_space<vmem>>, %arg11: memref<1x1x32xf32, #tpu.memory_space<vmem>>, %arg12: memref<1x32x32xf32, #tpu.memory_space<vmem>>, %arg13: memref<1x1x32xf32, #tpu.memory_space<vmem>>, %arg14: memref<1x1x32xf32, #tpu.memory_space<vmem>>, %arg15: memref<1x1x32xf32, #tpu.memory_space<vmem>>, %arg16: memref<2x8x32xf32, #tpu.memory_space<vmem>>, %arg17: memref<16x32xf32, #tpu.memory_space<vmem>>, %arg18: memref<16x32xf32, #tpu.memory_space<vmem>>, %arg19: memref<2x8x32xf32, #tpu.memory_space<vmem>>) attributes {dimension_semantics = [#tpu.dimension_semantics<parallel>, #tpu.dimension_semantics<arbitrary>], iteration_bounds = array<i64: 1, 2>, scalar_prefetch = 0 : i64, scratch_operands = 3 : i64, tpu.core_type = #tpu.core_type<tc>, window_params = [{transform_indices = @transform_0, window_bounds = array<i64: 2, 8, 32>}, {transform_indices = @transform_1, window_bounds = array<i64: 2, 8, 32>}, {transform_indices = @transform_2, window_bounds = array<i64: 1, 32, 32>}, {transform_indices = @transform_3, window_bounds = array<i64: 1, 1, 32>}, {transform_indices = @transform_4, window_bounds = array<i64: 1, 32, 64>}, {transform_indices = @transform_5, window_bounds = array<i64: 1, 1, 64>}, {transform_indices = @transform_6, window_bounds = array<i64: 1, 1, 32>}, {transform_indices = @transform_7, window_bounds = array<i64: 1, 1, 32>}, {transform_indices = @transform_8, window_bounds = array<i64: 1, 32, 32>}, {transform_indices = @transform_9, window_bounds = array<i64: 1, 1, 32>}, {transform_indices = @transform_10, window_bounds = array<i64: 1, 32, 32>}, {transform_indices = @transform_11, window_bounds = array<i64: 1, 1, 32>}, {transform_indices = @transform_12, window_bounds = array<i64: 1, 1, 32>}, {transform_indices = @transform_13, window_bounds = array<i64: 1, 1, 32>}, {transform_indices = @transform_14, window_bounds = array<i64: 2, 8, 32>}]} {
    %c0_i32 = arith.constant 0 : i32
    %0 = arith.cmpi eq, %arg1, %c0_i32 : i32
    %1 = arith.extui %0 : i1 to i32
    %c0_i32_0 = arith.constant 0 : i32
    %2 = arith.cmpi ne, %1, %c0_i32_0 : i32
    scf.if %2 {
      %c0_85 = arith.constant 0 : index
      %c0_86 = arith.constant 0 : index
      %c0_87 = arith.constant 0 : index
      %164 = vector.load %arg2[%c0_85, %c0_86, %c0_87] : memref<2x8x32xf32, #tpu.memory_space<vmem>>, vector<2x8x32xf32>
      %165 = vector.shape_cast %164 : vector<2x8x32xf32> to vector<16x32xf32>
      %c0_88 = arith.constant 0 : index
      %c0_89 = arith.constant 0 : index
      %166 = vector.load %arg17[%c0_88, %c0_89] : memref<16x32xf32, #tpu.memory_space<vmem>>, vector<16x32xf32>
      tpu.vector_store %arg17[%c0_88, %c0_89], %165 {strides = array<i32>} : memref<16x32xf32, #tpu.memory_space<vmem>>, vector<16x32xf32>,
      %c0_90 = arith.constant 0 : index
      %c0_91 = arith.constant 0 : index
      %c0_92 = arith.constant 0 : index
      %167 = vector.load %arg3[%c0_90, %c0_91, %c0_92] : memref<2x8x32xf32, #tpu.memory_space<vmem>>, vector<2x8x32xf32>
      %168 = vector.shape_cast %167 : vector<2x8x32xf32> to vector<16x32xf32>
      %c0_93 = arith.constant 0 : index
      %c0_94 = arith.constant 0 : index
      %169 = vector.load %arg18[%c0_93, %c0_94] : memref<16x32xf32, #tpu.memory_space<vmem>>, vector<16x32xf32>
      tpu.vector_store %arg18[%c0_93, %c0_94], %168 {strides = array<i32>} : memref<16x32xf32, #tpu.memory_space<vmem>>, vector<16x32xf32>,
    } else {
    }
    %c0 = arith.constant 0 : index
    %c0_1 = arith.constant 0 : index
    %3 = vector.load %arg17[%c0, %c0_1] : memref<16x32xf32, #tpu.memory_space<vmem>>, vector<16x32xf32>
    %c0_2 = arith.constant 0 : index
    %c0_3 = arith.constant 0 : index
    %4 = vector.load %arg18[%c0_2, %c0_3] : memref<16x32xf32, #tpu.memory_space<vmem>>, vector<16x32xf32>
    %c0_4 = arith.constant 0 : index
    %c0_5 = arith.constant 0 : index
    %c0_6 = arith.constant 0 : index
    %5 = vector.load %arg4[%c0_4, %c0_5, %c0_6] : memref<1x32x32xf32, #tpu.memory_space<vmem>>, vector<1x32x32xf32>
    %6 = vector.shape_cast %5 : vector<1x32x32xf32> to vector<32x32xf32>
    %cst = arith.constant dense<0.000000e+00> : vector<16x32xf32>
    %7 = tpu.matmul %3, %6, %cst {dimension_numbers = #tpu.dot_dimension_numbers<[1], [0], [0], [1], [0, 0, 1, 1], [], []>} : vector<16x32xf32>, vector<32x32xf32>, vector<16x32xf32> -> vector<16x32xf32>
    %c0_7 = arith.constant 0 : index
    %c0_8 = arith.constant 0 : index
    %c0_9 = arith.constant 0 : index
    %8 = vector.load %arg5[%c0_7, %c0_8, %c0_9] : memref<1x1x32xf32, #tpu.memory_space<vmem>>, vector<1x1x32xf32>
    %9 = vector.shape_cast %8 : vector<1x1x32xf32> to vector<1x32xf32>
    %10 = vector.broadcast %9 : vector<1x32xf32> to vector<16x32xf32>
    %11 = arith.addf %7, %10 : vector<16x32xf32>
    %c0_10 = arith.constant 0 : index
    %c0_11 = arith.constant 0 : index
    %c0_12 = arith.constant 0 : index
    %12 = vector.load %arg6[%c0_10, %c0_11, %c0_12] : memref<1x32x64xf32, #tpu.memory_space<vmem>>, vector<1x32x64xf32>
    %13 = vector.shape_cast %12 : vector<1x32x64xf32> to vector<32x64xf32>
    %cst_13 = arith.constant dense<0.000000e+00> : vector<16x64xf32>
    %14 = tpu.matmul %4, %13, %cst_13 {dimension_numbers = #tpu.dot_dimension_numbers<[1], [0], [0], [1], [0, 0, 1, 1], [], []>} : vector<16x32xf32>, vector<32x64xf32>, vector<16x64xf32> -> vector<16x64xf32>
    %c0_14 = arith.constant 0 : index
    %c0_15 = arith.constant 0 : index
    %c0_16 = arith.constant 0 : index
    %15 = vector.load %arg7[%c0_14, %c0_15, %c0_16] : memref<1x1x64xf32, #tpu.memory_space<vmem>>, vector<1x1x64xf32>
    %16 = vector.shape_cast %15 : vector<1x1x64xf32> to vector<1x64xf32>
    %17 = vector.broadcast %16 : vector<1x64xf32> to vector<16x64xf32>
    %18 = arith.addf %14, %17 : vector<16x64xf32>
    %19 = vector.shape_cast %11 : vector<16x32xf32> to vector<2x8x32xf32>
    %20 = vector.extract_strided_slice %18 {offsets = [0, 0], sizes = [16, 32], strides = [1, 1]} : vector<16x64xf32> to vector<16x32xf32>
    %21 = vector.shape_cast %20 : vector<16x32xf32> to vector<2x8x32xf32>
    %22 = vector.extract_strided_slice %18 {offsets = [0, 32], sizes = [16, 32], strides = [1, 1]} : vector<16x64xf32> to vector<16x32xf32>
    %23 = vector.shape_cast %22 : vector<16x32xf32> to vector<2x8x32xf32>
    %24 = vector.extract_strided_slice %19 {offsets = [0, 0, 0], sizes = [2, 8, 8], strides = [1, 1, 1]} : vector<2x8x32xf32> to vector<2x8x8xf32>
    %25 = vector.extract_strided_slice %21 {offsets = [0, 0, 0], sizes = [2, 8, 8], strides = [1, 1, 1]} : vector<2x8x32xf32> to vector<2x8x8xf32>
    %26 = vector.extract_strided_slice %23 {offsets = [0, 0, 0], sizes = [2, 8, 8], strides = [1, 1, 1]} : vector<2x8x32xf32> to vector<2x8x8xf32>
    "tpu.trace_start"() <{level = 10 : i32, message = "bqd,bkd->bqk"}> : () -> ()
    %cst_17 = arith.constant dense<0.000000e+00> : vector<2x8x8xf32>
    %27 = tpu.matmul %24, %25, %cst_17 {dimension_numbers = #tpu.dot_dimension_numbers<[2], [2], [1], [1], [0, 0, 0, 1, 1, 1], [0], [0]>} : vector<2x8x8xf32>, vector<2x8x8xf32>, vector<2x8x8xf32> -> vector<2x8x8xf32>
    "tpu.trace_stop"() : () -> ()
    %cst_18 = arith.constant dense<0xFF800000> : vector<2x8xf32>
    %28 = vector.multi_reduction <maximumf>, %27, %cst_18 [2] : vector<2x8x8xf32> to vector<2x8xf32>
    %29 = vector.shape_cast %28 : vector<2x8xf32> to vector<2x8x1xf32>
    %30 = vector.broadcast %29 : vector<2x8x1xf32> to vector<2x8x8xf32>
    %31 = arith.subf %27, %30 : vector<2x8x8xf32>
    %32 = math.exp %31 : vector<2x8x8xf32>
    %cst_19 = arith.constant dense<0.000000e+00> : vector<2x8xf32>
    %33 = vector.multi_reduction <add>, %32, %cst_19 [2] : vector<2x8x8xf32> to vector<2x8xf32>
    %34 = vector.shape_cast %33 : vector<2x8xf32> to vector<2x8x1xf32>
    %35 = tpu.reciprocal %34 {approx = true} : vector<2x8x1xf32> -> vector<2x8x1xf32>
    %36 = vector.broadcast %35 : vector<2x8x1xf32> to vector<2x8x8xf32>
    %37 = arith.mulf %32, %36 : vector<2x8x8xf32>
    "tpu.trace_start"() <{level = 10 : i32, message = "bqk,bkd->bqd"}> : () -> ()
    %cst_20 = arith.constant dense<0.000000e+00> : vector<2x8x8xf32>
    %38 = tpu.matmul %37, %26, %cst_20 {dimension_numbers = #tpu.dot_dimension_numbers<[2], [1], [1], [2], [0, 0, 0, 1, 1, 2], [0], [0]>} : vector<2x8x8xf32>, vector<2x8x8xf32>, vector<2x8x8xf32> -> vector<2x8x8xf32>
    "tpu.trace_stop"() : () -> ()
    %c0_21 = arith.constant 0 : index
    %c0_22 = arith.constant 0 : index
    %c0_23 = arith.constant 0 : index
    %39 = vector.load %arg19[%c0_21, %c0_22, %c0_23] : memref<2x8x32xf32, #tpu.memory_space<vmem>>, vector<2x8x8xf32>
    tpu.vector_store %arg19[%c0_21, %c0_22, %c0_23], %38 {strides = array<i32>} : memref<2x8x32xf32, #tpu.memory_space<vmem>>, vector<2x8x8xf32>,
    %40 = vector.extract_strided_slice %19 {offsets = [0, 0, 8], sizes = [2, 8, 8], strides = [1, 1, 1]} : vector<2x8x32xf32> to vector<2x8x8xf32>
    %41 = vector.extract_strided_slice %21 {offsets = [0, 0, 8], sizes = [2, 8, 8], strides = [1, 1, 1]} : vector<2x8x32xf32> to vector<2x8x8xf32>
    %42 = vector.extract_strided_slice %23 {offsets = [0, 0, 8], sizes = [2, 8, 8], strides = [1, 1, 1]} : vector<2x8x32xf32> to vector<2x8x8xf32>
    "tpu.trace_start"() <{level = 10 : i32, message = "bqd,bkd->bqk"}> : () -> ()
    %cst_24 = arith.constant dense<0.000000e+00> : vector<2x8x8xf32>
    %43 = tpu.matmul %40, %41, %cst_24 {dimension_numbers = #tpu.dot_dimension_numbers<[2], [2], [1], [1], [0, 0, 0, 1, 1, 1], [0], [0]>} : vector<2x8x8xf32>, vector<2x8x8xf32>, vector<2x8x8xf32> -> vector<2x8x8xf32>
    "tpu.trace_stop"() : () -> ()
    %cst_25 = arith.constant dense<0xFF800000> : vector<2x8xf32>
    %44 = vector.multi_reduction <maximumf>, %43, %cst_25 [2] : vector<2x8x8xf32> to vector<2x8xf32>
    %45 = vector.shape_cast %44 : vector<2x8xf32> to vector<2x8x1xf32>
    %46 = vector.broadcast %45 : vector<2x8x1xf32> to vector<2x8x8xf32>
    %47 = arith.subf %43, %46 : vector<2x8x8xf32>
    %48 = math.exp %47 : vector<2x8x8xf32>
    %cst_26 = arith.constant dense<0.000000e+00> : vector<2x8xf32>
    %49 = vector.multi_reduction <add>, %48, %cst_26 [2] : vector<2x8x8xf32> to vector<2x8xf32>
    %50 = vector.shape_cast %49 : vector<2x8xf32> to vector<2x8x1xf32>
    %51 = tpu.reciprocal %50 {approx = true} : vector<2x8x1xf32> -> vector<2x8x1xf32>
    %52 = vector.broadcast %51 : vector<2x8x1xf32> to vector<2x8x8xf32>
    %53 = arith.mulf %48, %52 : vector<2x8x8xf32>
    "tpu.trace_start"() <{level = 10 : i32, message = "bqk,bkd->bqd"}> : () -> ()
    %cst_27 = arith.constant dense<0.000000e+00> : vector<2x8x8xf32>
    %54 = tpu.matmul %53, %42, %cst_27 {dimension_numbers = #tpu.dot_dimension_numbers<[2], [1], [1], [2], [0, 0, 0, 1, 1, 2], [0], [0]>} : vector<2x8x8xf32>, vector<2x8x8xf32>, vector<2x8x8xf32> -> vector<2x8x8xf32>
    "tpu.trace_stop"() : () -> ()
    %c0_28 = arith.constant 0 : index
    %c0_29 = arith.constant 0 : index
    %c8 = arith.constant 8 : index
    %55 = vector.load %arg19[%c0_28, %c0_29, %c8] : memref<2x8x32xf32, #tpu.memory_space<vmem>>, vector<2x8x8xf32>
    tpu.vector_store %arg19[%c0_28, %c0_29, %c8], %54 {strides = array<i32>} : memref<2x8x32xf32, #tpu.memory_space<vmem>>, vector<2x8x8xf32>,
    %56 = vector.extract_strided_slice %19 {offsets = [0, 0, 16], sizes = [2, 8, 8], strides = [1, 1, 1]} : vector<2x8x32xf32> to vector<2x8x8xf32>
    %57 = vector.extract_strided_slice %21 {offsets = [0, 0, 16], sizes = [2, 8, 8], strides = [1, 1, 1]} : vector<2x8x32xf32> to vector<2x8x8xf32>
    %58 = vector.extract_strided_slice %23 {offsets = [0, 0, 16], sizes = [2, 8, 8], strides = [1, 1, 1]} : vector<2x8x32xf32> to vector<2x8x8xf32>
    "tpu.trace_start"() <{level = 10 : i32, message = "bqd,bkd->bqk"}> : () -> ()
    %cst_30 = arith.constant dense<0.000000e+00> : vector<2x8x8xf32>
    %59 = tpu.matmul %56, %57, %cst_30 {dimension_numbers = #tpu.dot_dimension_numbers<[2], [2], [1], [1], [0, 0, 0, 1, 1, 1], [0], [0]>} : vector<2x8x8xf32>, vector<2x8x8xf32>, vector<2x8x8xf32> -> vector<2x8x8xf32>
    "tpu.trace_stop"() : () -> ()
    %cst_31 = arith.constant dense<0xFF800000> : vector<2x8xf32>
    %60 = vector.multi_reduction <maximumf>, %59, %cst_31 [2] : vector<2x8x8xf32> to vector<2x8xf32>
    %61 = vector.shape_cast %60 : vector<2x8xf32> to vector<2x8x1xf32>
    %62 = vector.broadcast %61 : vector<2x8x1xf32> to vector<2x8x8xf32>
    %63 = arith.subf %59, %62 : vector<2x8x8xf32>
    %64 = math.exp %63 : vector<2x8x8xf32>
    %cst_32 = arith.constant dense<0.000000e+00> : vector<2x8xf32>
    %65 = vector.multi_reduction <add>, %64, %cst_32 [2] : vector<2x8x8xf32> to vector<2x8xf32>
    %66 = vector.shape_cast %65 : vector<2x8xf32> to vector<2x8x1xf32>
    %67 = tpu.reciprocal %66 {approx = true} : vector<2x8x1xf32> -> vector<2x8x1xf32>
    %68 = vector.broadcast %67 : vector<2x8x1xf32> to vector<2x8x8xf32>
    %69 = arith.mulf %64, %68 : vector<2x8x8xf32>
    "tpu.trace_start"() <{level = 10 : i32, message = "bqk,bkd->bqd"}> : () -> ()
    %cst_33 = arith.constant dense<0.000000e+00> : vector<2x8x8xf32>
    %70 = tpu.matmul %69, %58, %cst_33 {dimension_numbers = #tpu.dot_dimension_numbers<[2], [1], [1], [2], [0, 0, 0, 1, 1, 2], [0], [0]>} : vector<2x8x8xf32>, vector<2x8x8xf32>, vector<2x8x8xf32> -> vector<2x8x8xf32>
    "tpu.trace_stop"() : () -> ()
    %c0_34 = arith.constant 0 : index
    %c0_35 = arith.constant 0 : index
    %c16 = arith.constant 16 : index
    %71 = vector.load %arg19[%c0_34, %c0_35, %c16] : memref<2x8x32xf32, #tpu.memory_space<vmem>>, vector<2x8x8xf32>
    tpu.vector_store %arg19[%c0_34, %c0_35, %c16], %70 {strides = array<i32>} : memref<2x8x32xf32, #tpu.memory_space<vmem>>, vector<2x8x8xf32>,
    %72 = vector.extract_strided_slice %19 {offsets = [0, 0, 24], sizes = [2, 8, 8], strides = [1, 1, 1]} : vector<2x8x32xf32> to vector<2x8x8xf32>
    %73 = vector.extract_strided_slice %21 {offsets = [0, 0, 24], sizes = [2, 8, 8], strides = [1, 1, 1]} : vector<2x8x32xf32> to vector<2x8x8xf32>
    %74 = vector.extract_strided_slice %23 {offsets = [0, 0, 24], sizes = [2, 8, 8], strides = [1, 1, 1]} : vector<2x8x32xf32> to vector<2x8x8xf32>
    "tpu.trace_start"() <{level = 10 : i32, message = "bqd,bkd->bqk"}> : () -> ()
    %cst_36 = arith.constant dense<0.000000e+00> : vector<2x8x8xf32>
    %75 = tpu.matmul %72, %73, %cst_36 {dimension_numbers = #tpu.dot_dimension_numbers<[2], [2], [1], [1], [0, 0, 0, 1, 1, 1], [0], [0]>} : vector<2x8x8xf32>, vector<2x8x8xf32>, vector<2x8x8xf32> -> vector<2x8x8xf32>
    "tpu.trace_stop"() : () -> ()
    %cst_37 = arith.constant dense<0xFF800000> : vector<2x8xf32>
    %76 = vector.multi_reduction <maximumf>, %75, %cst_37 [2] : vector<2x8x8xf32> to vector<2x8xf32>
    %77 = vector.shape_cast %76 : vector<2x8xf32> to vector<2x8x1xf32>
    %78 = vector.broadcast %77 : vector<2x8x1xf32> to vector<2x8x8xf32>
    %79 = arith.subf %75, %78 : vector<2x8x8xf32>
    %80 = math.exp %79 : vector<2x8x8xf32>
    %cst_38 = arith.constant dense<0.000000e+00> : vector<2x8xf32>
    %81 = vector.multi_reduction <add>, %80, %cst_38 [2] : vector<2x8x8xf32> to vector<2x8xf32>
    %82 = vector.shape_cast %81 : vector<2x8xf32> to vector<2x8x1xf32>
    %83 = tpu.reciprocal %82 {approx = true} : vector<2x8x1xf32> -> vector<2x8x1xf32>
    %84 = vector.broadcast %83 : vector<2x8x1xf32> to vector<2x8x8xf32>
    %85 = arith.mulf %80, %84 : vector<2x8x8xf32>
    "tpu.trace_start"() <{level = 10 : i32, message = "bqk,bkd->bqd"}> : () -> ()
    %cst_39 = arith.constant dense<0.000000e+00> : vector<2x8x8xf32>
    %86 = tpu.matmul %85, %74, %cst_39 {dimension_numbers = #tpu.dot_dimension_numbers<[2], [1], [1], [2], [0, 0, 0, 1, 1, 2], [0], [0]>} : vector<2x8x8xf32>, vector<2x8x8xf32>, vector<2x8x8xf32> -> vector<2x8x8xf32>
    "tpu.trace_stop"() : () -> ()
    %c0_40 = arith.constant 0 : index
    %c0_41 = arith.constant 0 : index
    %c24 = arith.constant 24 : index
    %87 = vector.load %arg19[%c0_40, %c0_41, %c24] : memref<2x8x32xf32, #tpu.memory_space<vmem>>, vector<2x8x8xf32>
    tpu.vector_store %arg19[%c0_40, %c0_41, %c24], %86 {strides = array<i32>} : memref<2x8x32xf32, #tpu.memory_space<vmem>>, vector<2x8x8xf32>,
    %c0_42 = arith.constant 0 : index
    %c0_43 = arith.constant 0 : index
    %c0_44 = arith.constant 0 : index
    %88 = vector.load %arg19[%c0_42, %c0_43, %c0_44] : memref<2x8x32xf32, #tpu.memory_space<vmem>>, vector<2x8x32xf32>
    %89 = vector.shape_cast %88 : vector<2x8x32xf32> to vector<16x32xf32>
    %90 = arith.addf %89, %3 : vector<16x32xf32>
    %c0_45 = arith.constant 0 : index
    %c0_46 = arith.constant 0 : index
    %c0_47 = arith.constant 0 : index
    %91 = vector.load %arg8[%c0_45, %c0_46, %c0_47] : memref<1x1x32xf32, #tpu.memory_space<vmem>>, vector<1x1x32xf32>
    %92 = vector.shape_cast %91 : vector<1x1x32xf32> to vector<1x32xf32>
    %c0_48 = arith.constant 0 : index
    %c0_49 = arith.constant 0 : index
    %c0_50 = arith.constant 0 : index
    %93 = vector.load %arg9[%c0_48, %c0_49, %c0_50] : memref<1x1x32xf32, #tpu.memory_space<vmem>>, vector<1x1x32xf32>
    %94 = vector.shape_cast %93 : vector<1x1x32xf32> to vector<1x32xf32>
    %cst_51 = arith.constant dense<0.000000e+00> : vector<16xf32>
    %95 = vector.multi_reduction <add>, %90, %cst_51 [1] : vector<16x32xf32> to vector<16xf32>
    %96 = vector.shape_cast %95 : vector<16xf32> to vector<16x1xf32>
    %cst_52 = arith.constant 3.200000e+01 : f32
    %97 = vector.broadcast %cst_52 : f32 to vector<16x1xf32>
    %98 = arith.divf %96, %97 : vector<16x1xf32>
    %99 = vector.broadcast %98 : vector<16x1xf32> to vector<16x32xf32>
    %100 = arith.subf %90, %99 : vector<16x32xf32>
    %101 = arith.mulf %100, %100 : vector<16x32xf32>
    %cst_53 = arith.constant dense<0.000000e+00> : vector<16xf32>
    %102 = vector.multi_reduction <add>, %101, %cst_53 [1] : vector<16x32xf32> to vector<16xf32>
    %103 = vector.shape_cast %102 : vector<16xf32> to vector<16x1xf32>
    %cst_54 = arith.constant 3.200000e+01 : f32
    %104 = vector.broadcast %cst_54 : f32 to vector<16x1xf32>
    %105 = arith.divf %103, %104 : vector<16x1xf32>
    %106 = vector.broadcast %98 : vector<16x1xf32> to vector<16x32xf32>
    %107 = arith.subf %90, %106 : vector<16x32xf32>
    %cst_55 = arith.constant 9.99999974E-6 : f32
    %108 = vector.broadcast %cst_55 : f32 to vector<16x1xf32>
    %109 = arith.addf %105, %108 : vector<16x1xf32>
    %110 = math.rsqrt %109 : vector<16x1xf32>
    %111 = vector.broadcast %110 : vector<16x1xf32> to vector<16x32xf32>
    %112 = arith.mulf %107, %111 : vector<16x32xf32>
    %113 = vector.broadcast %92 : vector<1x32xf32> to vector<16x32xf32>
    %114 = arith.mulf %112, %113 : vector<16x32xf32>
    %115 = vector.broadcast %94 : vector<1x32xf32> to vector<16x32xf32>
    %116 = arith.addf %114, %115 : vector<16x32xf32>
    %c0_56 = arith.constant 0 : index
    %c0_57 = arith.constant 0 : index
    %c0_58 = arith.constant 0 : index
    %117 = vector.load %arg10[%c0_56, %c0_57, %c0_58] : memref<1x32x32xf32, #tpu.memory_space<vmem>>, vector<1x32x32xf32>
    %118 = vector.shape_cast %117 : vector<1x32x32xf32> to vector<32x32xf32>
    %cst_59 = arith.constant dense<0.000000e+00> : vector<16x32xf32>
    %119 = tpu.matmul %116, %118, %cst_59 {dimension_numbers = #tpu.dot_dimension_numbers<[1], [0], [0], [1], [0, 0, 1, 1], [], []>} : vector<16x32xf32>, vector<32x32xf32>, vector<16x32xf32> -> vector<16x32xf32>
    %c0_60 = arith.constant 0 : index
    %c0_61 = arith.constant 0 : index
    %c0_62 = arith.constant 0 : index
    %120 = vector.load %arg11[%c0_60, %c0_61, %c0_62] : memref<1x1x32xf32, #tpu.memory_space<vmem>>, vector<1x1x32xf32>
    %121 = vector.shape_cast %120 : vector<1x1x32xf32> to vector<1x32xf32>
    %122 = vector.broadcast %121 : vector<1x32xf32> to vector<16x32xf32>
    %123 = arith.addf %119, %122 : vector<16x32xf32>
    %cst_63 = arith.constant 0.000000e+00 : f32
    %124 = vector.broadcast %cst_63 : f32 to vector<16x32xf32>
    %125 = arith.maximumf %123, %124 : vector<16x32xf32>
    %c0_64 = arith.constant 0 : index
    %c0_65 = arith.constant 0 : index
    %c0_66 = arith.constant 0 : index
    %126 = vector.load %arg12[%c0_64, %c0_65, %c0_66] : memref<1x32x32xf32, #tpu.memory_space<vmem>>, vector<1x32x32xf32>
    %127 = vector.shape_cast %126 : vector<1x32x32xf32> to vector<32x32xf32>
    %cst_67 = arith.constant dense<0.000000e+00> : vector<16x32xf32>
    %128 = tpu.matmul %125, %127, %cst_67 {dimension_numbers = #tpu.dot_dimension_numbers<[1], [0], [0], [1], [0, 0, 1, 1], [], []>} : vector<16x32xf32>, vector<32x32xf32>, vector<16x32xf32> -> vector<16x32xf32>
    %c0_68 = arith.constant 0 : index
    %c0_69 = arith.constant 0 : index
    %c0_70 = arith.constant 0 : index
    %129 = vector.load %arg13[%c0_68, %c0_69, %c0_70] : memref<1x1x32xf32, #tpu.memory_space<vmem>>, vector<1x1x32xf32>
    %130 = vector.shape_cast %129 : vector<1x1x32xf32> to vector<1x32xf32>
    %131 = vector.broadcast %130 : vector<1x32xf32> to vector<16x32xf32>
    %132 = arith.addf %128, %131 : vector<16x32xf32>
    %133 = arith.addf %116, %132 : vector<16x32xf32>
    %c0_71 = arith.constant 0 : index
    %c0_72 = arith.constant 0 : index
    %c0_73 = arith.constant 0 : index
    %134 = vector.load %arg14[%c0_71, %c0_72, %c0_73] : memref<1x1x32xf32, #tpu.memory_space<vmem>>, vector<1x1x32xf32>
    %135 = vector.shape_cast %134 : vector<1x1x32xf32> to vector<1x32xf32>
    %c0_74 = arith.constant 0 : index
    %c0_75 = arith.constant 0 : index
    %c0_76 = arith.constant 0 : index
    %136 = vector.load %arg15[%c0_74, %c0_75, %c0_76] : memref<1x1x32xf32, #tpu.memory_space<vmem>>, vector<1x1x32xf32>
    %137 = vector.shape_cast %136 : vector<1x1x32xf32> to vector<1x32xf32>
    %cst_77 = arith.constant dense<0.000000e+00> : vector<16xf32>
    %138 = vector.multi_reduction <add>, %133, %cst_77 [1] : vector<16x32xf32> to vector<16xf32>
    %139 = vector.shape_cast %138 : vector<16xf32> to vector<16x1xf32>
    %cst_78 = arith.constant 3.200000e+01 : f32
    %140 = vector.broadcast %cst_78 : f32 to vector<16x1xf32>
    %141 = arith.divf %139, %140 : vector<16x1xf32>
    %142 = vector.broadcast %141 : vector<16x1xf32> to vector<16x32xf32>
    %143 = arith.subf %133, %142 : vector<16x32xf32>
    %144 = arith.mulf %143, %143 : vector<16x32xf32>
    %cst_79 = arith.constant dense<0.000000e+00> : vector<16xf32>
    %145 = vector.multi_reduction <add>, %144, %cst_79 [1] : vector<16x32xf32> to vector<16xf32>
    %146 = vector.shape_cast %145 : vector<16xf32> to vector<16x1xf32>
    %cst_80 = arith.constant 3.200000e+01 : f32
    %147 = vector.broadcast %cst_80 : f32 to vector<16x1xf32>
    %148 = arith.divf %146, %147 : vector<16x1xf32>
    %149 = vector.broadcast %141 : vector<16x1xf32> to vector<16x32xf32>
    %150 = arith.subf %133, %149 : vector<16x32xf32>
    %cst_81 = arith.constant 9.99999974E-6 : f32
    %151 = vector.broadcast %cst_81 : f32 to vector<16x1xf32>
    %152 = arith.addf %148, %151 : vector<16x1xf32>
    %153 = math.rsqrt %152 : vector<16x1xf32>
    %154 = vector.broadcast %153 : vector<16x1xf32> to vector<16x32xf32>
    %155 = arith.mulf %150, %154 : vector<16x32xf32>
    %156 = vector.broadcast %135 : vector<1x32xf32> to vector<16x32xf32>
    %157 = arith.mulf %155, %156 : vector<16x32xf32>
    %158 = vector.broadcast %137 : vector<1x32xf32> to vector<16x32xf32>
    %159 = arith.addf %157, %158 : vector<16x32xf32>
    %c0_82 = arith.constant 0 : index
    %c0_83 = arith.constant 0 : index
    %160 = vector.load %arg17[%c0_82, %c0_83] : memref<16x32xf32, #tpu.memory_space<vmem>>, vector<16x32xf32>
    tpu.vector_store %arg17[%c0_82, %c0_83], %159 {strides = array<i32>} : memref<16x32xf32, #tpu.memory_space<vmem>>, vector<16x32xf32>,
    %c1_i32 = arith.constant 1 : i32
    %161 = arith.cmpi eq, %arg1, %c1_i32 : i32
    %162 = arith.extui %161 : i1 to i32
    %c0_i32_84 = arith.constant 0 : i32
    %163 = arith.cmpi ne, %162, %c0_i32_84 : i32
    scf.if %163 {
      %164 = vector.shape_cast %159 : vector<16x32xf32> to vector<2x8x32xf32>
      %c0_85 = arith.constant 0 : index
      %c0_86 = arith.constant 0 : index
      %c0_87 = arith.constant 0 : index
      %165 = vector.load %arg16[%c0_85, %c0_86, %c0_87] : memref<2x8x32xf32, #tpu.memory_space<vmem>>, vector<2x8x32xf32>
      tpu.vector_store %arg16[%c0_85, %c0_86, %c0_87], %164 {strides = array<i32>} : memref<2x8x32xf32, #tpu.memory_space<vmem>>, vector<2x8x32xf32>,
    } else {
    }
    return
  }
  func.func @transform_0(%arg0: i32, %arg1: i32) -> (i32, i32, i32) {
    %c0_i32 = arith.constant 0 : i32
    %c0_i32_0 = arith.constant 0 : i32
    %c0_i32_1 = arith.constant 0 : i32
    return %arg0, %c0_i32, %c0_i32_0 : i32, i32, i32
  }
  func.func @transform_1(%arg0: i32, %arg1: i32) -> (i32, i32, i32) {
    %c0_i32 = arith.constant 0 : i32
    %c0_i32_0 = arith.constant 0 : i32
    %c0_i32_1 = arith.constant 0 : i32
    return %arg0, %c0_i32, %c0_i32_0 : i32, i32, i32
  }
  func.func @transform_2(%arg0: i32, %arg1: i32) -> (i32, i32, i32) {
    %c0_i32 = arith.constant 0 : i32
    %c0_i32_0 = arith.constant 0 : i32
    %c0_i32_1 = arith.constant 0 : i32
    return %arg1, %c0_i32, %c0_i32_0 : i32, i32, i32
  }
  func.func @transform_3(%arg0: i32, %arg1: i32) -> (i32, i32, i32) {
    %c0_i32 = arith.constant 0 : i32
    %c0_i32_0 = arith.constant 0 : i32
    %c0_i32_1 = arith.constant 0 : i32
    return %arg1, %c0_i32, %c0_i32_0 : i32, i32, i32
  }
  func.func @transform_4(%arg0: i32, %arg1: i32) -> (i32, i32, i32) {
    %c0_i32 = arith.constant 0 : i32
    %c0_i32_0 = arith.constant 0 : i32
    %c0_i32_1 = arith.constant 0 : i32
    return %arg1, %c0_i32, %c0_i32_0 : i32, i32, i32
  }
  func.func @transform_5(%arg0: i32, %arg1: i32) -> (i32, i32, i32) {
    %c0_i32 = arith.constant 0 : i32
    %c0_i32_0 = arith.constant 0 : i32
    %c0_i32_1 = arith.constant 0 : i32
    return %arg1, %c0_i32, %c0_i32_0 : i32, i32, i32
  }
  func.func @transform_6(%arg0: i32, %arg1: i32) -> (i32, i32, i32) {
    %c0_i32 = arith.constant 0 : i32
    %c0_i32_0 = arith.constant 0 : i32
    %c0_i32_1 = arith.constant 0 : i32
    return %arg1, %c0_i32, %c0_i32_0 : i32, i32, i32
  }
  func.func @transform_7(%arg0: i32, %arg1: i32) -> (i32, i32, i32) {
    %c0_i32 = arith.constant 0 : i32
    %c0_i32_0 = arith.constant 0 : i32
    %c0_i32_1 = arith.constant 0 : i32
    return %arg1, %c0_i32, %c0_i32_0 : i32, i32, i32
  }
  func.func @transform_8(%arg0: i32, %arg1: i32) -> (i32, i32, i32) {
    %c0_i32 = arith.constant 0 : i32
    %c0_i32_0 = arith.constant 0 : i32
    %c0_i32_1 = arith.constant 0 : i32
    return %arg1, %c0_i32, %c0_i32_0 : i32, i32, i32
  }
  func.func @transform_9(%arg0: i32, %arg1: i32) -> (i32, i32, i32) {
    %c0_i32 = arith.constant 0 : i32
    %c0_i32_0 = arith.constant 0 : i32
    %c0_i32_1 = arith.constant 0 : i32
    return %arg1, %c0_i32, %c0_i32_0 : i32, i32, i32
  }
  func.func @transform_10(%arg0: i32, %arg1: i32) -> (i32, i32, i32) {
    %c0_i32 = arith.constant 0 : i32
    %c0_i32_0 = arith.constant 0 : i32
    %c0_i32_1 = arith.constant 0 : i32
    return %arg1, %c0_i32, %c0_i32_0 : i32, i32, i32
  }
  func.func @transform_11(%arg0: i32, %arg1: i32) -> (i32, i32, i32) {
    %c0_i32 = arith.constant 0 : i32
    %c0_i32_0 = arith.constant 0 : i32
    %c0_i32_1 = arith.constant 0 : i32
    return %arg1, %c0_i32, %c0_i32_0 : i32, i32, i32
  }
  func.func @transform_12(%arg0: i32, %arg1: i32) -> (i32, i32, i32) {
    %c0_i32 = arith.constant 0 : i32
    %c0_i32_0 = arith.constant 0 : i32
    %c0_i32_1 = arith.constant 0 : i32
    return %arg1, %c0_i32, %c0_i32_0 : i32, i32, i32
  }
  func.func @transform_13(%arg0: i32, %arg1: i32) -> (i32, i32, i32) {
    %c0_i32 = arith.constant 0 : i32
    %c0_i32_0 = arith.constant 0 : i32
    %c0_i32_1 = arith.constant 0 : i32
    return %arg1, %c0_i32, %c0_i32_0 : i32, i32, i32
  }
  func.func @transform_14(%arg0: i32, %arg1: i32) -> (i32, i32, i32) {
    %c0_i32 = arith.constant 0 : i32
    %c0_i32_0 = arith.constant 0 : i32
    %c0_i32_1 = arith.constant 0 : i32
    return %arg0, %c0_i32, %c0_i32_0 : i32, i32, i32
  }
}

</mosaic_0001>

<llo_original>
// kernel: tpu_custom_call.1
$region0: #{tpu_custom_call.1}
  #allocation0 [shape = 'u32[]', space=smem, size = 0x4, offset = 0x4, fixed_abs, tag = 'smem constant byte address 0x4 - core index']
  #allocation1 [shape = 'u32[72,128]{1,0:T(1,128)}', space=vmem, size = 0x9000, scoped, tag = 'internal scratch']
  #allocation2 [shape = 'f32[16,32]{1,0:T(8,128)}', space=vmem, size = 0x2000, scoped, tag = 'scratch operand']
  #allocation3 [shape = 'f32[16,32]{1,0:T(8,128)}', space=vmem, size = 0x2000, scoped, tag = 'scratch operand']
  #allocation4 [shape = 'f32[2,8,32]{2,1,0:T(8,128)}', space=vmem, size = 0x2000, scoped, tag = 'scratch operand']
  %s0 = inlined_call_operand.hbm [shape: f32[2,8,32], index: 0, kind: input, shape index: {}]
  %s1 = inlined_call_operand.hbm [shape: f32[2,8,32], index: 1, kind: input, shape index: {}]
  %s2 = inlined_call_operand.hbm [shape: f32[2,32,32], index: 2, kind: input, shape index: {}]
  %s3 = inlined_call_operand.vmem [shape: f32[2,1,32], index: 3, kind: input, shape index: {}]
  %s4 = inlined_call_operand.hbm [shape: f32[2,32,64], index: 4, kind: input, shape index: {}]
  %s5 = inlined_call_operand.vmem [shape: f32[2,1,64], index: 5, kind: input, shape index: {}]
  %s6 = inlined_call_operand.hbm [shape: f32[2,1,32], index: 6, kind: input, shape index: {}]
  %s7 = inlined_call_operand.vmem [shape: f32[2,1,32], index: 7, kind: input, shape index: {}]
  %s8 = inlined_call_operand.hbm [shape: f32[2,32,32], index: 8, kind: input, shape index: {}]
  %s9 = inlined_call_operand.vmem [shape: f32[2,1,32], index: 9, kind: input, shape index: {}]
  %s10 = inlined_call_operand.hbm [shape: f32[2,32,32], index: 10, kind: input, shape index: {}]
  %s11 = inlined_call_operand.vmem [shape: f32[2,1,32], index: 11, kind: input, shape index: {}]
  %s12 = inlined_call_operand.hbm [shape: f32[2,1,32], index: 12, kind: input, shape index: {}]
  %s13 = inlined_call_operand.vmem [shape: f32[2,1,32], index: 13, kind: input, shape index: {}]
  %s14 = inlined_call_operand.hbm [shape: f32[2,8,32], index: 14, kind: output, shape index: {}]
  %s15 = sld [smem:[#allocation0]]
  $region129: #{tpu_custom_call.1} parent=0
    _
  %s17 = ssub.s32 1, %s15
  %s18 = scalar_select 0, %s17, %s15
  $region1: #{tpu_custom_call.1} parent=0
    #allocation5 [shape = 'u8[8192]{0}', space=vmem, size = 0x2000, scoped, tag = 'input window, operand 0, single buffered']
    #allocation6 [shape = 's32[2]{0}', space=sflag, size = 0x8, scoped, tag = 'scoped memory for tpu_custom_call.1']
    #allocation7 [shape = 's32[2]{0}', space=sflag, size = 0x8, scoped, tag = 'scoped memory for tpu_custom_call.1']
    #allocation8 [shape = 'u8[8192]{0}', space=vmem, size = 0x2000, scoped, tag = 'input window, operand 1, single buffered']
    #allocation9 [shape = 's32[1]{0}', space=sflag, size = 0x4, scoped, tag = 'scoped memory for tpu_custom_call.1']
    #allocation10 [shape = 'u8[32768]{0}', space=vmem, size = 0x8000, scoped, tag = 'input window, operand 2']
    #allocation11 [shape = 'u8[32768]{0}', space=vmem, size = 0x8000, scoped, tag = 'input window, operand 4']
    #allocation12 [shape = 'u8[1024]{0}', space=vmem, size = 0x400, scoped, tag = 'input window, operand 6']
    #allocation13 [shape = 'u8[32768]{0}', space=vmem, size = 0x8000, scoped, tag = 'input window, operand 8']
    #allocation14 [shape = 'u8[32768]{0}', space=vmem, size = 0x8000, scoped, tag = 'input window, operand 10']
    #allocation15 [shape = 'u8[1024]{0}', space=vmem, size = 0x400, scoped, tag = 'input window, operand 12']
    #allocation16 [shape = 'u8[8192]{0}', space=vmem, size = 0x2000, scoped, tag = 'output window, operand 0, single buffered']
    %19 = vsyncpa [#allocation6], 0
    %20 = vsyncpa [#allocation9], 0
    %21 = vsyncpa [#allocation7], 0
    loop: start=0, step=1, limit=4
    $region2: #{tpu_custom_call.1} parent=1 // loop_pre_header
      _
    $region3: #{tpu_custom_call.1} parent=1 // loop_header
      %s23 = sphi 0, %s27
      %p24 = scmp.ge.s32.totalorder %s23, 4
      %s30 = sphi 0, %s42
      %s31 = sphi 0, %s38
      %s32 = sphi 0, %s30
      %s33 = sphi 0, %s31
      %s34 = sphi 0, %s32
      %s35 = sphi 0, %s33
      %s45 = sphi 0, %s47
      %s48 = sphi 0, %s45
      %s49 = sphi 0, %s48
      %s65 = sphi 0, %s49
      %s71 = sphi 0, %s73
      %s74 = sphi 0, %s71
      %s75 = sphi 0, %s74
      %s91 = sphi 0, %s75
      %s97 = sphi 0, %s99
      %s100 = sphi 0, %s97
      %s101 = sphi 0, %s100
      %s117 = sphi 0, %s101
      %s123 = sphi 0, %s125
      %s126 = sphi 0, %s123
      %s127 = sphi 0, %s126
      %s143 = sphi 0, %s127
      %s149 = sphi 0, %s151
      %s152 = sphi 0, %s149
      %s153 = sphi 0, %s152
      %s169 = sphi 0, %s153
      %s175 = sphi 0, %s177
      %s178 = sphi 0, %s175
      %s179 = sphi 0, %s178
      %s195 = sphi 0, %s179
      %s201 = sphi 0, %s203
      %s204 = sphi 0, %s201
      %s205 = sphi 0, %s204
      %s221 = sphi 0, %s205
      %s227 = sphi 0, %s229
      %s230 = sphi 0, %s227
      %s231 = sphi 0, %s230
      %s247 = sphi 0, %s231
      %s253 = sphi 0, %s255
      %s256 = sphi 0, %s253
      %s257 = sphi 0, %s256
      %s273 = sphi 0, %s257
      %s279 = sphi 0, %s281
      %s282 = sphi 0, %s279
      %s283 = sphi 0, %s282
      %s299 = sphi 0, %s283
      %s305 = sphi 0, %s307
      %s308 = sphi 0, %s305
      %s309 = sphi 0, %s308
      %s325 = sphi 0, %s309
      %s331 = sphi 0, %s333
      %s334 = sphi 0, %s331
      %s335 = sphi 0, %s334
      %s351 = sphi 0, %s335
      %s357 = sphi 0, %s359
      %s360 = sphi 0, %s357
      %s361 = sphi 0, %s360
      %s377 = sphi 0, %s361
      %s383 = sphi 0, %s385
      %s386 = sphi 0, %s383
      %s387 = sphi 0, %s386
      %s403 = sphi 0, %s387
      %s409 = sphi 0, %s411
      %s412 = sphi 0, %s409
      %s413 = sphi 0, %s412
      %s429 = sphi 0, %s413
    $region4: #{tpu_custom_call.1} parent=1 // loop_header_branch
      %26 = sbr.rel (%p24) target = $region8
    $region5: #{tpu_custom_call.1} parent=1 // loop_body
      %s28 = ssub.s32 %s23, 1
      %s29 = ssub.s32 %s23, 2
      %s36 = sadd.s32 1, %s31
      %p37 = scmp.ge.s32.totalorder %s36, 2
      %s38 = scalar_select %p37, 0, %s36
      %s39 = sadd.s32 1, %s30
      %s40 = scalar_select %p37, %s39, %s30
      %p41 = scmp.ge.s32.totalorder %s40, 1
      %s42 = scalar_select %p41, 0, %s40
      %s43 = ssub.s32 %s30, %s42
      %p44 = scmp.eq.s32.totalorder %s43, 0
      %s46 = sadd.s32 %s45, 1
      %s47 = scalar_select %p44, %s45, %s46
      %p50 = pneg %p44
      %p51 = scmp.eq.s32.totalorder %s23, 1
      %p52 = por %p50, %p51
      %p53 = scmp.ne.s32.totalorder %s45, %s48
      %p54 = scmp.eq.s32.totalorder %s23, 0
      %p55 = por %p53, %p54
      %p56 = scmp.ne.s32.totalorder %s45, %s48
      %p57 = scmp.eq.s32.totalorder %s28, 1
      %p58 = por %p56, %p57
      %p59 = scmp.ne.s32.totalorder %s48, %s49
      %p60 = scmp.eq.s32.totalorder %s28, 0
      %p61 = por %p59, %p60
      %p62 = scmp.ne.s32.totalorder %s48, %s49
      %p63 = scmp.eq.s32.totalorder %s29, 1
      %p64 = por %p62, %p63
      %p66 = scmp.ne.s32.totalorder %s49, %s65
      %p67 = scmp.eq.s32.totalorder %s29, 0
      %p68 = por %p66, %p67
      %s69 = ssub.s32 %s30, %s42
      %p70 = scmp.eq.s32.totalorder %s69, 0
      %s72 = sadd.s32 %s71, 1
      %s73 = scalar_select %p70, %s71, %s72
      %p76 = pneg %p70
      %p77 = scmp.eq.s32.totalorder %s23, 1
      %p78 = por %p76, %p77
      %p79 = scmp.ne.s32.totalorder %s71, %s74
      %p80 = scmp.eq.s32.totalorder %s23, 0
      %p81 = por %p79, %p80
      %p82 = scmp.ne.s32.totalorder %s71, %s74
      %p83 = scmp.eq.s32.totalorder %s28, 1
      %p84 = por %p82, %p83
      %p85 = scmp.ne.s32.totalorder %s74, %s75
      %p86 = scmp.eq.s32.totalorder %s28, 0
      %p87 = por %p85, %p86
      %p88 = scmp.ne.s32.totalorder %s74, %s75
      %p89 = scmp.eq.s32.totalorder %s29, 1
      %p90 = por %p88, %p89
      %p92 = scmp.ne.s32.totalorder %s75, %s91
      %p93 = scmp.eq.s32.totalorder %s29, 0
      %p94 = por %p92, %p93
      %s95 = ssub.s32 %s31, %s38
      %p96 = scmp.eq.s32.totalorder %s95, 0
      %s98 = sadd.s32 %s97, 1
      %s99 = scalar_select %p96, %s97, %s98
      %p102 = pneg %p96
      %p103 = scmp.eq.s32.totalorder %s23, 1
      %p104 = por %p102, %p103
      %p105 = scmp.ne.s32.totalorder %s97, %s100
      %p106 = scmp.eq.s32.totalorder %s23, 0
      %p107 = por %p105, %p106
      %p108 = scmp.ne.s32.totalorder %s97, %s100
      %p109 = scmp.eq.s32.totalorder %s28, 1
      %p110 = por %p108, %p109
      %p111 = scmp.ne.s32.totalorder %s100, %s101
      %p112 = scmp.eq.s32.totalorder %s28, 0
      %p113 = por %p111, %p112
      %p114 = scmp.ne.s32.totalorder %s100, %s101
      %p115 = scmp.eq.s32.totalorder %s29, 1
      %p116 = por %p114, %p115
      %p118 = scmp.ne.s32.totalorder %s101, %s117
      %p119 = scmp.eq.s32.totalorder %s29, 0
      %p120 = por %p118, %p119
      %s121 = ssub.s32 %s31, %s38
      %p122 = scmp.eq.s32.totalorder %s121, 0
      %s124 = sadd.s32 %s123, 1
      %s125 = scalar_select %p122, %s123, %s124
      %p128 = pneg %p122
      %p129 = scmp.eq.s32.totalorder %s23, 1
      %p130 = por %p128, %p129
      %p131 = scmp.ne.s32.totalorder %s123, %s126
      %p132 = scmp.eq.s32.totalorder %s23, 0
      %p133 = por %p131, %p132
      %p134 = scmp.ne.s32.totalorder %s123, %s126
      %p135 = scmp.eq.s32.totalorder %s28, 1
      %p136 = por %p134, %p135
      %p137 = scmp.ne.s32.totalorder %s126, %s127
      %p138 = scmp.eq.s32.totalorder %s28, 0
      %p139 = por %p137, %p138
      %p140 = scmp.ne.s32.totalorder %s126, %s127
      %p141 = scmp.eq.s32.totalorder %s29, 1
      %p142 = por %p140, %p141
      %p144 = scmp.ne.s32.totalorder %s127, %s143
      %p145 = scmp.eq.s32.totalorder %s29, 0
      %p146 = por %p144, %p145
      %s147 = ssub.s32 %s31, %s38
      %p148 = scmp.eq.s32.totalorder %s147, 0
      %s150 = sadd.s32 %s149, 1
      %s151 = scalar_select %p148, %s149, %s150
      %p154 = pneg %p148
      %p155 = scmp.eq.s32.totalorder %s23, 1
      %p156 = por %p154, %p155
      %p157 = scmp.ne.s32.totalorder %s149, %s152
      %p158 = scmp.eq.s32.totalorder %s23, 0
      %p159 = por %p157, %p158
      %p160 = scmp.ne.s32.totalorder %s149, %s152
      %p161 = scmp.eq.s32.totalorder %s28, 1
      %p162 = por %p160, %p161
      %p163 = scmp.ne.s32.totalorder %s152, %s153
      %p164 = scmp.eq.s32.totalorder %s28, 0
      %p165 = por %p163, %p164
      %p166 = scmp.ne.s32.totalorder %s152, %s153
      %p167 = scmp.eq.s32.totalorder %s29, 1
      %p168 = por %p166, %p167
      %p170 = scmp.ne.s32.totalorder %s153, %s169
      %p171 = scmp.eq.s32.totalorder %s29, 0
      %p172 = por %p170, %p171
      %s173 = ssub.s32 %s31, %s38
      %p174 = scmp.eq.s32.totalorder %s173, 0
      %s176 = sadd.s32 %s175, 1
      %s177 = scalar_select %p174, %s175, %s176
      %p180 = pneg %p174
      %p181 = scmp.eq.s32.totalorder %s23, 1
      %p182 = por %p180, %p181
      %p183 = scmp.ne.s32.totalorder %s175, %s178
      %p184 = scmp.eq.s32.totalorder %s23, 0
      %p185 = por %p183, %p184
      %p186 = scmp.ne.s32.totalorder %s175, %s178
      %p187 = scmp.eq.s32.totalorder %s28, 1
      %p188 = por %p186, %p187
      %p189 = scmp.ne.s32.totalorder %s178, %s179
      %p190 = scmp.eq.s32.totalorder %s28, 0
      %p191 = por %p189, %p190
      %p192 = scmp.ne.s32.totalorder %s178, %s179
      %p193 = scmp.eq.s32.totalorder %s29, 1
      %p194 = por %p192, %p193
      %p196 = scmp.ne.s32.totalorder %s179, %s195
      %p197 = scmp.eq.s32.totalorder %s29, 0
      %p198 = por %p196, %p197
      %s199 = ssub.s32 %s31, %s38
      %p200 = scmp.eq.s32.totalorder %s199, 0
      %s202 = sadd.s32 %s201, 1
      %s203 = scalar_select %p200, %s201, %s202
      %p206 = pneg %p200
      %p207 = scmp.eq.s32.totalorder %s23, 1
      %p208 = por %p206, %p207
      %p209 = scmp.ne.s32.totalorder %s201, %s204
      %p210 = scmp.eq.s32.totalorder %s23, 0
      %p211 = por %p209, %p210
      %p212 = scmp.ne.s32.totalorder %s201, %s204
      %p213 = scmp.eq.s32.totalorder %s28, 1
      %p214 = por %p212, %p213
      %p215 = scmp.ne.s32.totalorder %s204, %s205
      %p216 = scmp.eq.s32.totalorder %s28, 0
      %p217 = por %p215, %p216
      %p218 = scmp.ne.s32.totalorder %s204, %s205
      %p219 = scmp.eq.s32.totalorder %s29, 1
      %p220 = por %p218, %p219
      %p222 = scmp.ne.s32.totalorder %s205, %s221
      %p223 = scmp.eq.s32.totalorder %s29, 0
      %p224 = por %p222, %p223
      %s225 = ssub.s32 %s31, %s38
      %p226 = scmp.eq.s32.totalorder %s225, 0
      %s228 = sadd.s32 %s227, 1
      %s229 = scalar_select %p226, %s227, %s228
      %p232 = pneg %p226
      %p233 = scmp.eq.s32.totalorder %s23, 1
      %p234 = por %p232, %p233
      %p235 = scmp.ne.s32.totalorder %s227, %s230
      %p236 = scmp.eq.s32.totalorder %s23, 0
      %p237 = por %p235, %p236
      %p238 = scmp.ne.s32.totalorder %s227, %s230
      %p239 = scmp.eq.s32.totalorder %s28, 1
      %p240 = por %p238, %p239
      %p241 = scmp.ne.s32.totalorder %s230, %s231
      %p242 = scmp.eq.s32.totalorder %s28, 0
      %p243 = por %p241, %p242
      %p244 = scmp.ne.s32.totalorder %s230, %s231
      %p245 = scmp.eq.s32.totalorder %s29, 1
      %p246 = por %p244, %p245
      %p248 = scmp.ne.s32.totalorder %s231, %s247
      %p249 = scmp.eq.s32.totalorder %s29, 0
      %p250 = por %p248, %p249
      %s251 = ssub.s32 %s31, %s38
      %p252 = scmp.eq.s32.totalorder %s251, 0
      %s254 = sadd.s32 %s253, 1
      %s255 = scalar_select %p252, %s253, %s254
      %p258 = pneg %p252
      %p259 = scmp.eq.s32.totalorder %s23, 1
      %p260 = por %p258, %p259
      %p261 = scmp.ne.s32.totalorder %s253, %s256
      %p262 = scmp.eq.s32.totalorder %s23, 0
      %p263 = por %p261, %p262
      %p264 = scmp.ne.s32.totalorder %s253, %s256
      %p265 = scmp.eq.s32.totalorder %s28, 1
      %p266 = por %p264, %p265
      %p267 = scmp.ne.s32.totalorder %s256, %s257
      %p268 = scmp.eq.s32.totalorder %s28, 0
      %p269 = por %p267, %p268
      %p270 = scmp.ne.s32.totalorder %s256, %s257
      %p271 = scmp.eq.s32.totalorder %s29, 1
      %p272 = por %p270, %p271
      %p274 = scmp.ne.s32.totalorder %s257, %s273
      %p275 = scmp.eq.s32.totalorder %s29, 0
      %p276 = por %p274, %p275
      %s277 = ssub.s32 %s31, %s38
      %p278 = scmp.eq.s32.totalorder %s277, 0
      %s280 = sadd.s32 %s279, 1
      %s281 = scalar_select %p278, %s279, %s280
      %p284 = pneg %p278
      %p285 = scmp.eq.s32.totalorder %s23, 1
      %p286 = por %p284, %p285
      %p287 = scmp.ne.s32.totalorder %s279, %s282
      %p288 = scmp.eq.s32.totalorder %s23, 0
      %p289 = por %p287, %p288
      %p290 = scmp.ne.s32.totalorder %s279, %s282
      %p291 = scmp.eq.s32.totalorder %s28, 1
      %p292 = por %p290, %p291
      %p293 = scmp.ne.s32.totalorder %s282, %s283
      %p294 = scmp.eq.s32.totalorder %s28, 0
      %p295 = por %p293, %p294
      %p296 = scmp.ne.s32.totalorder %s282, %s283
      %p297 = scmp.eq.s32.totalorder %s29, 1
      %p298 = por %p296, %p297
      %p300 = scmp.ne.s32.totalorder %s283, %s299
      %p301 = scmp.eq.s32.totalorder %s29, 0
      %p302 = por %p300, %p301
      %s303 = ssub.s32 %s31, %s38
      %p304 = scmp.eq.s32.totalorder %s303, 0
      %s306 = sadd.s32 %s305, 1
      %s307 = scalar_select %p304, %s305, %s306
      %p310 = pneg %p304
      %p311 = scmp.eq.s32.totalorder %s23, 1
      %p312 = por %p310, %p311
      %p313 = scmp.ne.s32.totalorder %s305, %s308
      %p314 = scmp.eq.s32.totalorder %s23, 0
      %p315 = por %p313, %p314
      %p316 = scmp.ne.s32.totalorder %s305, %s308
      %p317 = scmp.eq.s32.totalorder %s28, 1
      %p318 = por %p316, %p317
      %p319 = scmp.ne.s32.totalorder %s308, %s309
      %p320 = scmp.eq.s32.totalorder %s28, 0
      %p321 = por %p319, %p320
      %p322 = scmp.ne.s32.totalorder %s308, %s309
      %p323 = scmp.eq.s32.totalorder %s29, 1
      %p324 = por %p322, %p323
      %p326 = scmp.ne.s32.totalorder %s309, %s325
      %p327 = scmp.eq.s32.totalorder %s29, 0
      %p328 = por %p326, %p327
      %s329 = ssub.s32 %s31, %s38
      %p330 = scmp.eq.s32.totalorder %s329, 0
      %s332 = sadd.s32 %s331, 1
      %s333 = scalar_select %p330, %s331, %s332
      %p336 = pneg %p330
      %p337 = scmp.eq.s32.totalorder %s23, 1
      %p338 = por %p336, %p337
      %p339 = scmp.ne.s32.totalorder %s331, %s334
      %p340 = scmp.eq.s32.totalorder %s23, 0
      %p341 = por %p339, %p340
      %p342 = scmp.ne.s32.totalorder %s331, %s334
      %p343 = scmp.eq.s32.totalorder %s28, 1
      %p344 = por %p342, %p343
      %p345 = scmp.ne.s32.totalorder %s334, %s335
      %p346 = scmp.eq.s32.totalorder %s28, 0
      %p347 = por %p345, %p346
      %p348 = scmp.ne.s32.totalorder %s334, %s335
      %p349 = scmp.eq.s32.totalorder %s29, 1
      %p350 = por %p348, %p349
      %p352 = scmp.ne.s32.totalorder %s335, %s351
      %p353 = scmp.eq.s32.totalorder %s29, 0
      %p354 = por %p352, %p353
      %s355 = ssub.s32 %s31, %s38
      %p356 = scmp.eq.s32.totalorder %s355, 0
      %s358 = sadd.s32 %s357, 1
      %s359 = scalar_select %p356, %s357, %s358
      %p362 = pneg %p356
      %p363 = scmp.eq.s32.totalorder %s23, 1
      %p364 = por %p362, %p363
      %p365 = scmp.ne.s32.totalorder %s357, %s360
      %p366 = scmp.eq.s32.totalorder %s23, 0
      %p367 = por %p365, %p366
      %p368 = scmp.ne.s32.totalorder %s357, %s360
      %p369 = scmp.eq.s32.totalorder %s28, 1
      %p370 = por %p368, %p369
      %p371 = scmp.ne.s32.totalorder %s360, %s361
      %p372 = scmp.eq.s32.totalorder %s28, 0
      %p373 = por %p371, %p372
      %p374 = scmp.ne.s32.totalorder %s360, %s361
      %p375 = scmp.eq.s32.totalorder %s29, 1
      %p376 = por %p374, %p375
      %p378 = scmp.ne.s32.totalorder %s361, %s377
      %p379 = scmp.eq.s32.totalorder %s29, 0
      %p380 = por %p378, %p379
      %s381 = ssub.s32 %s31, %s38
      %p382 = scmp.eq.s32.totalorder %s381, 0
      %s384 = sadd.s32 %s383, 1
      %s385 = scalar_select %p382, %s383, %s384
      %p388 = pneg %p382
      %p389 = scmp.eq.s32.totalorder %s23, 1
      %p390 = por %p388, %p389
      %p391 = scmp.ne.s32.totalorder %s383, %s386
      %p392 = scmp.eq.s32.totalorder %s23, 0
      %p393 = por %p391, %p392
      %p394 = scmp.ne.s32.totalorder %s383, %s386
      %p395 = scmp.eq.s32.totalorder %s28, 1
      %p396 = por %p394, %p395
      %p397 = scmp.ne.s32.totalorder %s386, %s387
      %p398 = scmp.eq.s32.totalorder %s28, 0
      %p399 = por %p397, %p398
      %p400 = scmp.ne.s32.totalorder %s386, %s387
      %p401 = scmp.eq.s32.totalorder %s29, 1
      %p402 = por %p400, %p401
      %p404 = scmp.ne.s32.totalorder %s387, %s403
      %p405 = scmp.eq.s32.totalorder %s29, 0
      %p406 = por %p404, %p405
      %s407 = ssub.s32 %s30, %s42
      %p408 = scmp.eq.s32.totalorder %s407, 0
      %s410 = sadd.s32 %s409, 1
      %s411 = scalar_select %p408, %s409, %s410
      %p414 = pneg %p408
      %p415 = scmp.eq.s32.totalorder %s23, 1
      %p416 = por %p414, %p415
      %p417 = scmp.ne.s32.totalorder %s409, %s412
      %p418 = scmp.eq.s32.totalorder %s23, 0
      %p419 = por %p417, %p418
      %p420 = scmp.ne.s32.totalorder %s409, %s412
      %p421 = scmp.eq.s32.totalorder %s28, 1
      %p422 = por %p420, %p421
      %p423 = scmp.ne.s32.totalorder %s412, %s413
      %p424 = scmp.eq.s32.totalorder %s28, 0
      %p425 = por %p423, %p424
      %p426 = scmp.ne.s32.totalorder %s412, %s413
      %p427 = scmp.eq.s32.totalorder %s29, 1
      %p428 = por %p426, %p427
      %p430 = scmp.ne.s32.totalorder %s413, %s429
      %p431 = scmp.eq.s32.totalorder %s29, 0
      %p432 = por %p430, %p431
      %p433 = scmp.le.s32.totalorder 1, %s23
      %p434 = scmp.lt.s32.totalorder %s23, 3
      %p435 = pnand %p433, %p434
      %p436 = pneg %p435
      // Predicated region
      $region9: #{tpu_custom_call.1} parent=5 // pred_check
        _
      $region10: #{tpu_custom_call.1} parent=5 // pred_check_branch
        %438 = sbr.rel (%p435) target = $region12
      $region11: #{tpu_custom_call.1} parent=5 // pred_region
        %s439 = ssub.s32 %s23, 1
        // Predicated region
        $region13: #{tpu_custom_call.1} parent=11 // pred_check
          %p440 = pneg %p61
        $region14: #{tpu_custom_call.1} parent=11 // pred_check_branch
          %442 = sbr.rel (%p440) target = $region16
        $region15: #{tpu_custom_call.1} parent=11 // pred_region
          %s443 = smul.u32 2, %s32
          %445 = vsyncadd [#allocation6], 0
          %s446 = smul.addr %s443, 8
          %s447 = scalar_lea.hbm %s0, %s446
          %s448 = sshll.u32 %s447, 4
          %s449 = int_to_ptr.hbm [resolvable:$true] %s448
          %s450 = sshll.u32 [#allocation5], 4
          %s451 = int_to_ptr.vmem [resolvable:$true] %s450
          %456 = dma.hbm_to_vmem [thread:$0]  %s449, 256, %s451, [#allocation6], 128, 128, 8
        $region16: #{tpu_custom_call.1} parent=11 // pred_fallthru
          _
        // Predicated region
        $region17: #{tpu_custom_call.1} parent=11 // pred_check
          %p457 = pneg %p87
        $region18: #{tpu_custom_call.1} parent=11 // pred_check_branch
          %459 = sbr.rel (%p457) target = $region20
        $region19: #{tpu_custom_call.1} parent=11 // pred_region
          %s460 = smul.u32 2, %s32
          %462 = vsyncadd [#allocation9], 0
          %s463 = smul.addr %s460, 8
          %s464 = scalar_lea.hbm %s1, %s463
          %s465 = sshll.u32 %s464, 4
          %s466 = int_to_ptr.hbm [resolvable:$true] %s465
          %s467 = sshll.u32 [#allocation8], 4
          %s468 = int_to_ptr.vmem [resolvable:$true] %s467
          %473 = dma.hbm_to_vmem [thread:$0]  %s466, 256, %s468, [#allocation9], 128, 128, 8
        $region20: #{tpu_custom_call.1} parent=11 // pred_fallthru
          _
      $region12: #{tpu_custom_call.1} parent=5 // pred_fallthru
        _
      %p474 = scmp.lt.s32.totalorder %s23, 2
      // Predicated region
      $region21: #{tpu_custom_call.1} parent=5 // pred_check
        %p475 = pneg %p474
      $region22: #{tpu_custom_call.1} parent=5 // pred_check_branch
        %477 = sbr.rel (%p475) target = $region24
      $region23: #{tpu_custom_call.1} parent=5 // pred_region
        // Predicated region
        $region25: #{tpu_custom_call.1} parent=23 // pred_check
          %p478 = pneg %p107
        $region26: #{tpu_custom_call.1} parent=23 // pred_check_branch
          %480 = sbr.rel (%p478) target = $region28
        $region27: #{tpu_custom_call.1} parent=23 // pred_region
          %s481 = sand.u32 %s23, 1
          %s482 = scalar_lea.sflag [#allocation6], %s481
          %s483 = sand.u32 %s97, 1
          %s484 = smul.addr %s483, 32
          %s485 = scalar_lea.vmem [#allocation10], %s484
          %487 = vsyncadd %s482, 0
          %s488 = smul.addr %s31, 4
          %s489 = smul.addr %s488, 8
          %s490 = scalar_lea.hbm %s2, %s489
          %s491 = sshll.u32 %s490, 4
          %s492 = int_to_ptr.hbm [resolvable:$true] %s491
          %s493 = sshll.u32 %s485, 4
          %s494 = int_to_ptr.vmem [resolvable:$true] %s493
          %499 = dma.hbm_to_vmem [thread:$0]  %s492, 512, %s494, %s482, 128, 128, 8
        $region28: #{tpu_custom_call.1} parent=23 // pred_fallthru
          _
        // Predicated region
        $region29: #{tpu_custom_call.1} parent=23 // pred_check
          %p500 = pneg %p133
        $region30: #{tpu_custom_call.1} parent=23 // pred_check_branch
          %502 = sbr.rel (%p500) target = $region32
        $region31: #{tpu_custom_call.1} parent=23 // pred_region
          %p503 = scmp.lt.s32.totalorder %s31, 1
          %s504 = scalar_select %p503, %s31, 1
          %s505 = scalar_lea.vmem %s3, %s504
        $region32: #{tpu_custom_call.1} parent=23 // pred_fallthru
          _
        // Predicated region
        $region33: #{tpu_custom_call.1} parent=23 // pred_check
          %p506 = pneg %p159
        $region34: #{tpu_custom_call.1} parent=23 // pred_check_branch
          %508 = sbr.rel (%p506) target = $region36
        $region35: #{tpu_custom_call.1} parent=23 // pred_region
          %s509 = sand.u32 %s23, 1
          %s510 = scalar_lea.sflag [#allocation6], %s509
          %s511 = sand.u32 %s149, 1
          %s512 = smul.addr %s511, 32
          %s513 = scalar_lea.vmem [#allocation11], %s512
          %515 = vsyncadd %s510, 0
          %s516 = smul.addr %s31, 4
          %s517 = smul.addr %s516, 8
          %s518 = scalar_lea.hbm %s4, %s517
          %s519 = sshll.u32 %s518, 4
          %s520 = int_to_ptr.hbm [resolvable:$true] %s519
          %s521 = sshll.u32 %s513, 4
          %s522 = int_to_ptr.vmem [resolvable:$true] %s521
          %527 = dma.hbm_to_vmem [thread:$0]  %s520, 512, %s522, %s510, 128, 128, 8
        $region36: #{tpu_custom_call.1} parent=23 // pred_fallthru
          _
        // Predicated region
        $region37: #{tpu_custom_call.1} parent=23 // pred_check
          %p528 = pneg %p185
        $region38: #{tpu_custom_call.1} parent=23 // pred_check_branch
          %530 = sbr.rel (%p528) target = $region40
        $region39: #{tpu_custom_call.1} parent=23 // pred_region
          %p531 = scmp.lt.s32.totalorder %s31, 1
          %s532 = scalar_select %p531, %s31, 1
          %s533 = scalar_lea.vmem %s5, %s532
        $region40: #{tpu_custom_call.1} parent=23 // pred_fallthru
          _
        // Predicated region
        $region41: #{tpu_custom_call.1} parent=23 // pred_check
          %p534 = pneg %p211
        $region42: #{tpu_custom_call.1} parent=23 // pred_check_branch
          %536 = sbr.rel (%p534) target = $region44
        $region43: #{tpu_custom_call.1} parent=23 // pred_region
          %s537 = sand.u32 %s23, 1
          %s538 = scalar_lea.sflag [#allocation6], %s537
          %s539 = sand.u32 %s201, 1
          %s540 = scalar_lea.vmem [#allocation12], %s539
          %542 = vsyncadd %s538, 0
          %s543 = scalar_lea.hbm %s6, %s31
          %s545 = sshll.u32 %s543, 4
          %s546 = int_to_ptr.hbm [resolvable:$true] %s545
          %s547 = sshll.u32 %s540, 4
          %s548 = int_to_ptr.vmem [resolvable:$true] %s547
          %550 = dma.hbm_to_vmem [thread:$0]  %s546, 16, %s548, %s538
        $region44: #{tpu_custom_call.1} parent=23 // pred_fallthru
          _
        // Predicated region
        $region45: #{tpu_custom_call.1} parent=23 // pred_check
          %p551 = pneg %p237
        $region46: #{tpu_custom_call.1} parent=23 // pred_check_branch
          %553 = sbr.rel (%p551) target = $region48
        $region47: #{tpu_custom_call.1} parent=23 // pred_region
          %p554 = scmp.lt.s32.totalorder %s31, 1
          %s555 = scalar_select %p554, %s31, 1
          %s556 = scalar_lea.vmem %s7, %s555
        $region48: #{tpu_custom_call.1} parent=23 // pred_fallthru
          _
        // Predicated region
        $region49: #{tpu_custom_call.1} parent=23 // pred_check
          %p557 = pneg %p263
        $region50: #{tpu_custom_call.1} parent=23 // pred_check_branch
          %559 = sbr.rel (%p557) target = $region52
        $region51: #{tpu_custom_call.1} parent=23 // pred_region
          %s560 = sand.u32 %s23, 1
          %s561 = scalar_lea.sflag [#allocation6], %s560
          %s562 = sand.u32 %s253, 1
          %s563 = smul.addr %s562, 32
          %s564 = scalar_lea.vmem [#allocation13], %s563
          %566 = vsyncadd %s561, 0
          %s567 = smul.addr %s31, 4
          %s568 = smul.addr %s567, 8
          %s569 = scalar_lea.hbm %s8, %s568
          %s570 = sshll.u32 %s569, 4
          %s571 = int_to_ptr.hbm [resolvable:$true] %s570
          %s572 = sshll.u32 %s564, 4
          %s573 = int_to_ptr.vmem [resolvable:$true] %s572
          %578 = dma.hbm_to_vmem [thread:$0]  %s571, 512, %s573, %s561, 128, 128, 8
        $region52: #{tpu_custom_call.1} parent=23 // pred_fallthru
          _
        // Predicated region
        $region53: #{tpu_custom_call.1} parent=23 // pred_check
          %p579 = pneg %p289
        $region54: #{tpu_custom_call.1} parent=23 // pred_check_branch
          %581 = sbr.rel (%p579) target = $region56
        $region55: #{tpu_custom_call.1} parent=23 // pred_region
          %p582 = scmp.lt.s32.totalorder %s31, 1
          %s583 = scalar_select %p582, %s31, 1
          %s584 = scalar_lea.vmem %s9, %s583
        $region56: #{tpu_custom_call.1} parent=23 // pred_fallthru
          _
        // Predicated region
        $region57: #{tpu_custom_call.1} parent=23 // pred_check
          %p585 = pneg %p315
        $region58: #{tpu_custom_call.1} parent=23 // pred_check_branch
          %587 = sbr.rel (%p585) target = $region60
        $region59: #{tpu_custom_call.1} parent=23 // pred_region
          %s588 = sand.u32 %s23, 1
          %s589 = scalar_lea.sflag [#allocation6], %s588
          %s590 = sand.u32 %s305, 1
          %s591 = smul.addr %s590, 32
          %s592 = scalar_lea.vmem [#allocation14], %s591
          %594 = vsyncadd %s589, 0
          %s595 = smul.addr %s31, 4
          %s596 = smul.addr %s595, 8
          %s597 = scalar_lea.hbm %s10, %s596
          %s598 = sshll.u32 %s597, 4
          %s599 = int_to_ptr.hbm [resolvable:$true] %s598
          %s600 = sshll.u32 %s592, 4
          %s601 = int_to_ptr.vmem [resolvable:$true] %s600
          %606 = dma.hbm_to_vmem [thread:$0]  %s599, 512, %s601, %s589, 128, 128, 8
        $region60: #{tpu_custom_call.1} parent=23 // pred_fallthru
          _
        // Predicated region
        $region61: #{tpu_custom_call.1} parent=23 // pred_check
          %p607 = pneg %p341
        $region62: #{tpu_custom_call.1} parent=23 // pred_check_branch
          %609 = sbr.rel (%p607) target = $region64
        $region63: #{tpu_custom_call.1} parent=23 // pred_region
          %p610 = scmp.lt.s32.totalorder %s31, 1
          %s611 = scalar_select %p610, %s31, 1
          %s612 = scalar_lea.vmem %s11, %s611
        $region64: #{tpu_custom_call.1} parent=23 // pred_fallthru
          _
        // Predicated region
        $region65: #{tpu_custom_call.1} parent=23 // pred_check
          %p613 = pneg %p367
        $region66: #{tpu_custom_call.1} parent=23 // pred_check_branch
          %615 = sbr.rel (%p613) target = $region68
        $region67: #{tpu_custom_call.1} parent=23 // pred_region
          %s616 = sand.u32 %s23, 1
          %s617 = scalar_lea.sflag [#allocation6], %s616
          %s618 = sand.u32 %s357, 1
          %s619 = scalar_lea.vmem [#allocation15], %s618
          %621 = vsyncadd %s617, 0
          %s622 = scalar_lea.hbm %s12, %s31
          %s624 = sshll.u32 %s622, 4
          %s625 = int_to_ptr.hbm [resolvable:$true] %s624
          %s626 = sshll.u32 %s619, 4
          %s627 = int_to_ptr.vmem [resolvable:$true] %s626
          %629 = dma.hbm_to_vmem [thread:$0]  %s625, 16, %s627, %s617
        $region68: #{tpu_custom_call.1} parent=23 // pred_fallthru
          _
        // Predicated region
        $region69: #{tpu_custom_call.1} parent=23 // pred_check
          %p630 = pneg %p393
        $region70: #{tpu_custom_call.1} parent=23 // pred_check_branch
          %632 = sbr.rel (%p630) target = $region72
        $region71: #{tpu_custom_call.1} parent=23 // pred_region
          %p633 = scmp.lt.s32.totalorder %s31, 1
          %s634 = scalar_select %p633, %s31, 1
          %s635 = scalar_lea.vmem %s13, %s634
        $region72: #{tpu_custom_call.1} parent=23 // pred_fallthru
          _
      $region24: #{tpu_custom_call.1} parent=5 // pred_fallthru
        _
      %p636 = scmp.le.s32.totalorder 1, %s23
      %p637 = scmp.lt.s32.totalorder %s23, 3
      %p638 = pnand %p636, %p637
      %p639 = pneg %p638
      // Predicated region
      $region73: #{tpu_custom_call.1} parent=5 // pred_check
        _
      $region74: #{tpu_custom_call.1} parent=5 // pred_check_branch
        %641 = sbr.rel (%p638) target = $region76
      $region75: #{tpu_custom_call.1} parent=5 // pred_region
        %s642 = ssub.s32 %s23, 1
        // Predicated region
        $region77: #{tpu_custom_call.1} parent=75 // pred_check
          %p643 = pneg %p61
        $region78: #{tpu_custom_call.1} parent=75 // pred_check_branch
          %645 = sbr.rel (%p643) target = $region80
        $region79: #{tpu_custom_call.1} parent=75 // pred_region
          %647 = dma.done [#allocation6], 256
        $region80: #{tpu_custom_call.1} parent=75 // pred_fallthru
          _
        // Predicated region
        $region81: #{tpu_custom_call.1} parent=75 // pred_check
          %p648 = pneg %p87
        $region82: #{tpu_custom_call.1} parent=75 // pred_check_branch
          %650 = sbr.rel (%p648) target = $region84
        $region83: #{tpu_custom_call.1} parent=75 // pred_region
          %652 = dma.done [#allocation9], 256
        $region84: #{tpu_custom_call.1} parent=75 // pred_fallthru
          _
        %s653 = sand.u32 %s28, 1
        %s654 = scalar_lea.sflag [#allocation6], %s653
        %s655 = sand.u32 %s100, 1
        %s656 = smul.addr %s655, 32
        %s657 = scalar_lea.vmem [#allocation10], %s656
        // Predicated region
        $region85: #{tpu_custom_call.1} parent=75 // pred_check
          %p658 = pneg %p113
        $region86: #{tpu_custom_call.1} parent=75 // pred_check_branch
          %660 = sbr.rel (%p658) target = $region88
        $region87: #{tpu_custom_call.1} parent=75 // pred_region
          %662 = dma.done %s654, 512
        $region88: #{tpu_custom_call.1} parent=75 // pred_fallthru
          _
        %s663 = sand.u32 %s28, 1
        %s664 = scalar_lea.sflag [#allocation6], %s663
        %s665 = sand.u32 %s152, 1
        %s666 = smul.addr %s665, 32
        %s667 = scalar_lea.vmem [#allocation11], %s666
        // Predicated region
        $region89: #{tpu_custom_call.1} parent=75 // pred_check
          %p668 = pneg %p165
        $region90: #{tpu_custom_call.1} parent=75 // pred_check_branch
          %670 = sbr.rel (%p668) target = $region92
        $region91: #{tpu_custom_call.1} parent=75 // pred_region
          %672 = dma.done %s664, 512
        $region92: #{tpu_custom_call.1} parent=75 // pred_fallthru
          _
        %s673 = sand.u32 %s28, 1
        %s674 = scalar_lea.sflag [#allocation6], %s673
        %s675 = sand.u32 %s204, 1
        %s676 = scalar_lea.vmem [#allocation12], %s675
        // Predicated region
        $region93: #{tpu_custom_call.1} parent=75 // pred_check
          %p677 = pneg %p217
        $region94: #{tpu_custom_call.1} parent=75 // pred_check_branch
          %679 = sbr.rel (%p677) target = $region96
        $region95: #{tpu_custom_call.1} parent=75 // pred_region
          %681 = dma.done %s674, 16
        $region96: #{tpu_custom_call.1} parent=75 // pred_fallthru
          _
        %s682 = sand.u32 %s28, 1
        %s683 = scalar_lea.sflag [#allocation6], %s682
        %s684 = sand.u32 %s256, 1
        %s685 = smul.addr %s684, 32
        %s686 = scalar_lea.vmem [#allocation13], %s685
        // Predicated region
        $region97: #{tpu_custom_call.1} parent=75 // pred_check
          %p687 = pneg %p269
        $region98: #{tpu_custom_call.1} parent=75 // pred_check_branch
          %689 = sbr.rel (%p687) target = $region100
        $region99: #{tpu_custom_call.1} parent=75 // pred_region
          %691 = dma.done %s683, 512
        $region100: #{tpu_custom_call.1} parent=75 // pred_fallthru
          _
        %s692 = sand.u32 %s28, 1
        %s693 = scalar_lea.sflag [#allocation6], %s692
        %s694 = sand.u32 %s308, 1
        %s695 = smul.addr %s694, 32
        %s696 = scalar_lea.vmem [#allocation14], %s695
        // Predicated region
        $region101: #{tpu_custom_call.1} parent=75 // pred_check
          %p697 = pneg %p321
        $region102: #{tpu_custom_call.1} parent=75 // pred_check_branch
          %699 = sbr.rel (%p697) target = $region104
        $region103: #{tpu_custom_call.1} parent=75 // pred_region
          %701 = dma.done %s693, 512
        $region104: #{tpu_custom_call.1} parent=75 // pred_fallthru
          _
        %s702 = sand.u32 %s28, 1
        %s703 = scalar_lea.sflag [#allocation6], %s702
        %s704 = sand.u32 %s360, 1
        %s705 = scalar_lea.vmem [#allocation15], %s704
        // Predicated region
        $region105: #{tpu_custom_call.1} parent=75 // pred_check
          %p706 = pneg %p373
        $region106: #{tpu_custom_call.1} parent=75 // pred_check_branch
          %708 = sbr.rel (%p706) target = $region108
        $region107: #{tpu_custom_call.1} parent=75 // pred_region
          %710 = dma.done %s703, 16
        $region108: #{tpu_custom_call.1} parent=75 // pred_fallthru
          _
        %p711 = pneg %p61
        %p712 = pneg %p58
        %p713 = pneg %p87
        %p714 = pneg %p84
        %s715 = sand.u32 %s28, 1
        %s716 = scalar_lea.sflag [#allocation6], %s715
        %s717 = sand.u32 %s100, 1
        %s718 = smul.addr %s717, 32
        %s719 = scalar_lea.vmem [#allocation10], %s718
        %p720 = pneg %p113
        %p721 = pneg %p110
        %p722 = scmp.lt.s32.totalorder %s33, 1
        %s723 = scalar_select %p722, %s33, 1
        %s724 = scalar_lea.vmem %s3, %s723
        %p725 = pneg %p139
        %p726 = pneg %p136
        %s727 = sand.u32 %s28, 1
        %s728 = scalar_lea.sflag [#allocation6], %s727
        %s729 = sand.u32 %s152, 1
        %s730 = smul.addr %s729, 32
        %s731 = scalar_lea.vmem [#allocation11], %s730
        %p732 = pneg %p165
        %p733 = pneg %p162
        %p734 = scmp.lt.s32.totalorder %s33, 1
        %s735 = scalar_select %p734, %s33, 1
        %s736 = scalar_lea.vmem %s5, %s735
        %p737 = pneg %p191
        %p738 = pneg %p188
        %s739 = sand.u32 %s28, 1
        %s740 = scalar_lea.sflag [#allocation6], %s739
        %s741 = sand.u32 %s204, 1
        %s742 = scalar_lea.vmem [#allocation12], %s741
        %p743 = pneg %p217
        %p744 = pneg %p214
        %p745 = scmp.lt.s32.totalorder %s33, 1
        %s746 = scalar_select %p745, %s33, 1
        %s747 = scalar_lea.vmem %s7, %s746
        %p748 = pneg %p243
        %p749 = pneg %p240
        %s750 = sand.u32 %s28, 1
        %s751 = scalar_lea.sflag [#allocation6], %s750
        %s752 = sand.u32 %s256, 1
        %s753 = smul.addr %s752, 32
        %s754 = scalar_lea.vmem [#allocation13], %s753
        %p755 = pneg %p269
        %p756 = pneg %p266
        %p757 = scmp.lt.s32.totalorder %s33, 1
        %s758 = scalar_select %p757, %s33, 1
        %s759 = scalar_lea.vmem %s9, %s758
        %p760 = pneg %p295
        %p761 = pneg %p292
        %s762 = sand.u32 %s28, 1
        %s763 = scalar_lea.sflag [#allocation6], %s762
        %s764 = sand.u32 %s308, 1
        %s765 = smul.addr %s764, 32
        %s766 = scalar_lea.vmem [#allocation14], %s765
        %p767 = pneg %p321
        %p768 = pneg %p318
        %p769 = scmp.lt.s32.totalorder %s33, 1
        %s770 = scalar_select %p769, %s33, 1
        %s771 = scalar_lea.vmem %s11, %s770
        %p772 = pneg %p347
        %p773 = pneg %p344
        %s774 = sand.u32 %s28, 1
        %s775 = scalar_lea.sflag [#allocation6], %s774
        %s776 = sand.u32 %s360, 1
        %s777 = scalar_lea.vmem [#allocation15], %s776
        %p778 = pneg %p373
        %p779 = pneg %p370
        %p780 = scmp.lt.s32.totalorder %s33, 1
        %s781 = scalar_select %p780, %s33, 1
        %s782 = scalar_lea.vmem %s13, %s781
        %p783 = pneg %p399
        %p784 = pneg %p396
        %p785 = pneg %p425
        %p786 = pneg %p422
        %s787 = smul.u32 2, %s32
        %s788 = smul.u32 2, %s32
        %p789 = scmp.lt.s32.totalorder %s33, 1
        %s790 = scalar_select %p789, %s33, 1
        %s791 = scalar_lea.vmem %s3, %s790
        %p792 = scmp.lt.s32.totalorder %s33, 1
        %s793 = scalar_select %p792, %s33, 1
        %s794 = scalar_lea.vmem %s5, %s793
        %p795 = scmp.lt.s32.totalorder %s33, 1
        %s796 = scalar_select %p795, %s33, 1
        %s797 = scalar_lea.vmem %s7, %s796
        %p798 = scmp.lt.s32.totalorder %s33, 1
        %s799 = scalar_select %p798, %s33, 1
        %s800 = scalar_lea.vmem %s9, %s799
        %p801 = scmp.lt.s32.totalorder %s33, 1
        %s802 = scalar_select %p801, %s33, 1
        %s803 = scalar_lea.vmem %s11, %s802
        %p804 = scmp.lt.s32.totalorder %s33, 1
        %s805 = scalar_select %p804, %s33, 1
        %s806 = scalar_lea.vmem %s13, %s805
        %s807 = smul.u32 2, %s32
        %p808 = scmp.eq.s32.totalorder %s33, 0
        // Predicated region
        $region109: #{tpu_custom_call.1} parent=75 // pred_check
          %p809 = pneg %p808
        $region110: #{tpu_custom_call.1} parent=75 // pred_check_branch
          %811 = sbr.rel (%p809) target = $region112
        $region111: #{tpu_custom_call.1} parent=75 // pred_region
          %v812 = vld [vmem:[#allocation5] sm:$0xff]
          %v813 = vld [vmem:[#allocation5 + $0x8] sm:$0xff]
          %vm814 = vcmask 261120
          %815 = vst.msk [vmem:[#allocation2] sm:$0xff] %vm814, %v812
          %816 = vst.msk [vmem:[#allocation2 + $0x8] sm:$0xff] %vm814, %v813
          %v817 = vld [vmem:[#allocation8] sm:$0xff]
          %v818 = vld [vmem:[#allocation8 + $0x8] sm:$0xff]
          %819 = vst.msk [vmem:[#allocation3] sm:$0xff] %vm814, %v817
          %820 = vst.msk [vmem:[#allocation3 + $0x8] sm:$0xff] %vm814, %v818
        $region112: #{tpu_custom_call.1} parent=75 // pred_fallthru
          _
        %v821 = vld [vmem:[#allocation2] sm:$0xff]
        %v822 = vld [vmem:[#allocation2 + $0x8] sm:$0xff]
        %v823 = vld [vmem:[#allocation3] sm:$0xff]
        %v824 = vld [vmem:[#allocation3 + $0x8] sm:$0xff]
        %v825 = vld [vmem:[%s657] sm:$0xff]
        %v826 = vld [vmem:[%s657 + $0x8] sm:$0xff]
        %v827 = vld [vmem:[%s657 + $0x10] sm:$0xff]
        %v828 = vld [vmem:[%s657 + $0x18] sm:$0xff]
        %v829 = vld [vmem:[%s791] sm:$0x1]
        %v831 = vperm.slane %v829, 0
        %vm833 = vcmask 261120
        %v835 = vsel %vm833, %v821, 0
        %v838 = vsel %vm833, %v822, 0
        %840 = vmatpush.msra.mxu0 0.0
        %841 = vmatpush.msra.mxu0 0.0
        %842 = vmatpush.msra.mxu0 0.0
        %843 = vmatpush.msra.mxu0 0.0
        %844 = vmatpush.msra.mxu0 0.0
        %845 = vmatpush.msra.mxu0 0.0
        %846 = vmatpush.msra.mxu0 0.0
        %847 = vmatpush.msra.mxu0 0.0
        %848 = vmatpush.msra.mxu0 0.0
        %849 = vmatpush.msra.mxu0 0.0
        %850 = vmatpush.msra.mxu0 0.0
        %851 = vmatpush.msra.mxu0 0.0
        %852 = vmatpush.msra.mxu0 %v828
        %853 = vmatpush.msra.mxu0 %v827
        %854 = vmatpush.msra.mxu0 %v826
        %855 = vmatpush.msra.mxu0 %v825
        %856 = vmatmul.f32.gmra.mxu0 %v835
        %v857 = vpop.f32.mrf.mxu0
        %v858 = vadd.f32 %v831, %v857
        %859 = vmatmul.f32.gmra.mxu0 %v838
        %v860 = vpop.f32.mrf.mxu0
        %v861 = vadd.f32 %v831, %v860
        %862 = vdwg.mxu0
        %v863 = vld [vmem:[%s667] sm:$0xff]
        %v864 = vld [vmem:[%s667 + $0x8] sm:$0xff]
        %v865 = vld [vmem:[%s667 + $0x10] sm:$0xff]
        %v866 = vld [vmem:[%s667 + $0x18] sm:$0xff]
        %v867 = vld [vmem:[%s794] sm:$0x1]
        %v869 = vperm.slane %v867, 0
        %v872 = vsel %vm833, %v823, 0
        %v875 = vsel %vm833, %v824, 0
        %877 = vmatpush.msra.mxu0 0.0
        %878 = vmatpush.msra.mxu0 0.0
        %879 = vmatpush.msra.mxu0 0.0
        %880 = vmatpush.msra.mxu0 0.0
        %881 = vmatpush.msra.mxu0 0.0
        %882 = vmatpush.msra.mxu0 0.0
        %883 = vmatpush.msra.mxu0 0.0
        %884 = vmatpush.msra.mxu0 0.0
        %885 = vmatpush.msra.mxu0 0.0
        %886 = vmatpush.msra.mxu0 0.0
        %887 = vmatpush.msra.mxu0 0.0
        %888 = vmatpush.msra.mxu0 0.0
        %889 = vmatpush.msra.mxu0 %v866
        %890 = vmatpush.msra.mxu0 %v865
        %891 = vmatpush.msra.mxu0 %v864
        %892 = vmatpush.msra.mxu0 %v863
        %893 = vmatmul.f32.gmra.mxu0 %v872
        %v894 = vpop.f32.mrf.mxu0
        %v895 = vadd.f32 %v869, %v894
        %896 = vmatmul.f32.gmra.mxu0 %v875
        %v897 = vpop.f32.mrf.mxu0
        %v898 = vadd.f32 %v869, %v897
        %899 = vdwg.mxu0
        %vm900 = vcmask 64512
        %v902 = vsel %vm900, %v858, 0
        %v905 = vsel %vm900, %v895, 0
        %907 = vmatpush.xpose.msra.mxu0 0.0
        %908 = vmatpush.xpose.msra.mxu0 0.0
        %909 = vmatpush.xpose.msra.mxu0 0.0
        %910 = vmatpush.xpose.msra.mxu0 0.0
        %911 = vmatpush.xpose.msra.mxu0 0.0
        %912 = vmatpush.xpose.msra.mxu0 0.0
        %913 = vmatpush.xpose.msra.mxu0 0.0
        %914 = vmatpush.xpose.msra.mxu0 0.0
        %915 = vmatpush.xpose.msra.mxu0 0.0
        %916 = vmatpush.xpose.msra.mxu0 0.0
        %917 = vmatpush.xpose.msra.mxu0 0.0
        %918 = vmatpush.xpose.msra.mxu0 0.0
        %919 = vmatpush.xpose.msra.mxu0 0.0
        %920 = vmatpush.xpose.msra.mxu0 0.0
        %921 = vmatpush.xpose.msra.mxu0 0.0
        %922 = vmatpush.xpose.msra.mxu0 %v905
        %923 = vmatmul.f32.gmra.mxu0 %v902
        %v924 = vpop.f32.mrf.mxu0
        %v925 = vadd.f32 0.0, %v924
        %926 = vdwg.mxu0
        %v928 = vsel %vm900, %v861, 0
        %v931 = vsel %vm900, %v898, 0
        %933 = vmatpush.xpose.msra.mxu0 0.0
        %934 = vmatpush.xpose.msra.mxu0 0.0
        %935 = vmatpush.xpose.msra.mxu0 0.0
        %936 = vmatpush.xpose.msra.mxu0 0.0
        %937 = vmatpush.xpose.msra.mxu0 0.0
        %938 = vmatpush.xpose.msra.mxu0 0.0
        %939 = vmatpush.xpose.msra.mxu0 0.0
        %940 = vmatpush.xpose.msra.mxu0 0.0
        %941 = vmatpush.xpose.msra.mxu0 0.0
        %942 = vmatpush.xpose.msra.mxu0 0.0
        %943 = vmatpush.xpose.msra.mxu0 0.0
        %944 = vmatpush.xpose.msra.mxu0 0.0
        %945 = vmatpush.xpose.msra.mxu0 0.0
        %946 = vmatpush.xpose.msra.mxu0 0.0
        %947 = vmatpush.xpose.msra.mxu0 0.0
        %948 = vmatpush.xpose.msra.mxu0 %v931
        %949 = vmatmul.f32.gmra.mxu0 %v928
        %v950 = vpop.f32.mrf.mxu0
        %v951 = vadd.f32 0.0, %v950
        %952 = vdwg.mxu0
        %v953 = vsel %vm900, %v925, -inf
        %954 = vmax.xlane.f32.xlu0 %v953
        %v955 = vpop.xlane.xlu0 %954
        %v956 = vsel %vm900, %v951, -inf
        %957 = vmax.xlane.f32.xlu0 %v956
        %v958 = vpop.xlane.xlu0 %957
        %v959 = vsub.f32 %v925, %v955
        %v960 = vsub.f32 %v951, %v958
        %v961 = vmul.f32 %v959, 1.442695
        %v962 = vpow.pop %v961
        %v963 = vmul.f32 %v960, 1.442695
        %v964 = vpow.pop %v963
        %v965 = vsel %vm900, %v962, 0.0
        %966 = vadd.xlane.f32.xlu0 %v965
        %v967 = vpop.xlane.xlu0 %966
        %v968 = vsel %vm900, %v964, 0.0
        %969 = vadd.xlane.f32.xlu0 %v968
        %v970 = vpop.xlane.xlu0 %969
        %v971 = vrcp.pop %v967
        %v972 = vrcp.pop %v970
        %v973 = vmul.f32 %v962, %v971
        %v974 = vmul.f32 %v964, %v972
        %975 = vrot.lane.b32.xlu0 %v895, 96
        %v976 = vpop.permute.xlu0 %975
        %v979 = vsel %vm900, %v973, 0
        %981 = vmatpush.msra.mxu0 0.0
        %982 = vmatpush.msra.mxu0 0.0
        %983 = vmatpush.msra.mxu0 0.0
        %984 = vmatpush.msra.mxu0 0.0
        %985 = vmatpush.msra.mxu0 0.0
        %986 = vmatpush.msra.mxu0 0.0
        %987 = vmatpush.msra.mxu0 0.0
        %988 = vmatpush.msra.mxu0 0.0
        %989 = vmatpush.msra.mxu0 0.0
        %990 = vmatpush.msra.mxu0 0.0
        %991 = vmatpush.msra.mxu0 0.0
        %992 = vmatpush.msra.mxu0 0.0
        %993 = vmatpush.msra.mxu0 0.0
        %994 = vmatpush.msra.mxu0 0.0
        %995 = vmatpush.msra.mxu0 0.0
        %996 = vmatpush.msra.mxu0 %v976
        %997 = vmatmul.f32.gmra.mxu0 %v979
        %v998 = vpop.f32.mrf.mxu0
        %v999 = vadd.f32 0.0, %v998
        %1000 = vdwg.mxu0
        %1001 = vrot.lane.b32.xlu0 %v898, 96
        %v1002 = vpop.permute.xlu0 %1001
        %v1005 = vsel %vm900, %v974, 0
        %1007 = vmatpush.msra.mxu0 0.0
        %1008 = vmatpush.msra.mxu0 0.0
        %1009 = vmatpush.msra.mxu0 0.0
        %1010 = vmatpush.msra.mxu0 0.0
        %1011 = vmatpush.msra.mxu0 0.0
        %1012 = vmatpush.msra.mxu0 0.0
        %1013 = vmatpush.msra.mxu0 0.0
        %1014 = vmatpush.msra.mxu0 0.0
        %1015 = vmatpush.msra.mxu0 0.0
        %1016 = vmatpush.msra.mxu0 0.0
        %1017 = vmatpush.msra.mxu0 0.0
        %1018 = vmatpush.msra.mxu0 0.0
        %1019 = vmatpush.msra.mxu0 0.0
        %1020 = vmatpush.msra.mxu0 0.0
        %1021 = vmatpush.msra.mxu0 0.0
        %1022 = vmatpush.msra.mxu0 %v1002
        %1023 = vmatmul.f32.gmra.mxu0 %v1005
        %v1024 = vpop.f32.mrf.mxu0
        %v1025 = vadd.f32 0.0, %v1024
        %1026 = vdwg.mxu0
        %1027 = vst.msk [vmem:[#allocation4] sm:$0xff] %vm900, %v999
        %1028 = vst.msk [vmem:[#allocation4 + $0x8] sm:$0xff] %vm900, %v1025
        %1029 = vrot.lane.b32.xlu0 %v858, 120
        %v1030 = vpop.permute.xlu0 %1029
        %1031 = vrot.lane.b32.xlu0 %v895, 120
        %v1032 = vpop.permute.xlu0 %1031
        %v1033 = vsel %vm900, %v1030, 0
        %v1035 = vsel %vm900, %v1032, 0
        %1037 = vmatpush.xpose.msra.mxu0 0.0
        %1038 = vmatpush.xpose.msra.mxu0 0.0
        %1039 = vmatpush.xpose.msra.mxu0 0.0
        %1040 = vmatpush.xpose.msra.mxu0 0.0
        %1041 = vmatpush.xpose.msra.mxu0 0.0
        %1042 = vmatpush.xpose.msra.mxu0 0.0
        %1043 = vmatpush.xpose.msra.mxu0 0.0
        %1044 = vmatpush.xpose.msra.mxu0 0.0
        %1045 = vmatpush.xpose.msra.mxu0 0.0
        %1046 = vmatpush.xpose.msra.mxu0 0.0
        %1047 = vmatpush.xpose.msra.mxu0 0.0
        %1048 = vmatpush.xpose.msra.mxu0 0.0
        %1049 = vmatpush.xpose.msra.mxu0 0.0
        %1050 = vmatpush.xpose.msra.mxu0 0.0
        %1051 = vmatpush.xpose.msra.mxu0 0.0
        %1052 = vmatpush.xpose.msra.mxu0 %v1035
        %1053 = vmatmul.f32.gmra.mxu0 %v1033
        %v1054 = vpop.f32.mrf.mxu0
        %v1055 = vadd.f32 0.0, %v1054
        %1056 = vdwg.mxu0
        %1057 = vrot.lane.b32.xlu0 %v861, 120
        %v1058 = vpop.permute.xlu0 %1057
        %1059 = vrot.lane.b32.xlu0 %v898, 120
        %v1060 = vpop.permute.xlu0 %1059
        %v1061 = vsel %vm900, %v1058, 0
        %v1063 = vsel %vm900, %v1060, 0
        %1065 = vmatpush.xpose.msra.mxu0 0.0
        %1066 = vmatpush.xpose.msra.mxu0 0.0
        %1067 = vmatpush.xpose.msra.mxu0 0.0
        %1068 = vmatpush.xpose.msra.mxu0 0.0
        %1069 = vmatpush.xpose.msra.mxu0 0.0
        %1070 = vmatpush.xpose.msra.mxu0 0.0
        %1071 = vmatpush.xpose.msra.mxu0 0.0
        %1072 = vmatpush.xpose.msra.mxu0 0.0
        %1073 = vmatpush.xpose.msra.mxu0 0.0
        %1074 = vmatpush.xpose.msra.mxu0 0.0
        %1075 = vmatpush.xpose.msra.mxu0 0.0
        %1076 = vmatpush.xpose.msra.mxu0 0.0
        %1077 = vmatpush.xpose.msra.mxu0 0.0
        %1078 = vmatpush.xpose.msra.mxu0 0.0
        %1079 = vmatpush.xpose.msra.mxu0 0.0
        %1080 = vmatpush.xpose.msra.mxu0 %v1063
        %1081 = vmatmul.f32.gmra.mxu0 %v1061
        %v1082 = vpop.f32.mrf.mxu0
        %v1083 = vadd.f32 0.0, %v1082
        %1084 = vdwg.mxu0
        %v1085 = vsel %vm900, %v1055, -inf
        %1086 = vmax.xlane.f32.xlu0 %v1085
        %v1087 = vpop.xlane.xlu0 %1086
        %v1088 = vsel %vm900, %v1083, -inf
        %1089 = vmax.xlane.f32.xlu0 %v1088
        %v1090 = vpop.xlane.xlu0 %1089
        %v1091 = vsub.f32 %v1055, %v1087
        %v1092 = vsub.f32 %v1083, %v1090
        %v1093 = vmul.f32 %v1091, 1.442695
        %v1094 = vpow.pop %v1093
        %v1095 = vmul.f32 %v1092, 1.442695
        %v1096 = vpow.pop %v1095
        %v1097 = vsel %vm900, %v1094, 0.0
        %1098 = vadd.xlane.f32.xlu0 %v1097
        %v1099 = vpop.xlane.xlu0 %1098
        %v1100 = vsel %vm900, %v1096, 0.0
        %1101 = vadd.xlane.f32.xlu0 %v1100
        %v1102 = vpop.xlane.xlu0 %1101
        %v1103 = vrcp.pop %v1099
        %v1104 = vrcp.pop %v1102
        %v1105 = vmul.f32 %v1094, %v1103
        %v1106 = vmul.f32 %v1096, %v1104
        %1107 = vrot.lane.b32.xlu0 %v895, 88
        %v1108 = vpop.permute.xlu0 %1107
        %v1111 = vsel %vm900, %v1105, 0
        %1113 = vmatpush.msra.mxu0 0.0
        %1114 = vmatpush.msra.mxu0 0.0
        %1115 = vmatpush.msra.mxu0 0.0
        %1116 = vmatpush.msra.mxu0 0.0
        %1117 = vmatpush.msra.mxu0 0.0
        %1118 = vmatpush.msra.mxu0 0.0
        %1119 = vmatpush.msra.mxu0 0.0
        %1120 = vmatpush.msra.mxu0 0.0
        %1121 = vmatpush.msra.mxu0 0.0
        %1122 = vmatpush.msra.mxu0 0.0
        %1123 = vmatpush.msra.mxu0 0.0
        %1124 = vmatpush.msra.mxu0 0.0
        %1125 = vmatpush.msra.mxu0 0.0
        %1126 = vmatpush.msra.mxu0 0.0
        %1127 = vmatpush.msra.mxu0 0.0
        %1128 = vmatpush.msra.mxu0 %v1108
        %1129 = vmatmul.f32.gmra.mxu0 %v1111
        %v1130 = vpop.f32.mrf.mxu0
        %v1131 = vadd.f32 0.0, %v1130
        %1132 = vdwg.mxu0
        %1133 = vrot.lane.b32.xlu0 %v898, 88
        %v1134 = vpop.permute.xlu0 %1133
        %v1137 = vsel %vm900, %v1106, 0
        %1139 = vmatpush.msra.mxu0 0.0
        %1140 = vmatpush.msra.mxu0 0.0
        %1141 = vmatpush.msra.mxu0 0.0
        %1142 = vmatpush.msra.mxu0 0.0
        %1143 = vmatpush.msra.mxu0 0.0
        %1144 = vmatpush.msra.mxu0 0.0
        %1145 = vmatpush.msra.mxu0 0.0
        %1146 = vmatpush.msra.mxu0 0.0
        %1147 = vmatpush.msra.mxu0 0.0
        %1148 = vmatpush.msra.mxu0 0.0
        %1149 = vmatpush.msra.mxu0 0.0
        %1150 = vmatpush.msra.mxu0 0.0
        %1151 = vmatpush.msra.mxu0 0.0
        %1152 = vmatpush.msra.mxu0 0.0
        %1153 = vmatpush.msra.mxu0 0.0
        %1154 = vmatpush.msra.mxu0 %v1134
        %1155 = vmatmul.f32.gmra.mxu0 %v1137
        %v1156 = vpop.f32.mrf.mxu0
        %v1157 = vadd.f32 0.0, %v1156
        %1158 = vdwg.mxu0
        %1161 = vrot.lane.b32.xlu0 %v1131, 8
        %v1162 = vpop.permute.xlu0 %1161
        %1163 = vrot.lane.b32.xlu0 %v1157, 8
        %v1164 = vpop.permute.xlu0 %1163
        %vm1167 = vcmask 130112
        %1168 = vst.msk [vmem:[#allocation4] sm:$0xff] %vm1167, %v1162
        %1169 = vst.msk [vmem:[#allocation4 + $0x8] sm:$0xff] %vm1167, %v1164
        %1170 = vrot.lane.b32.xlu0 %v858, 112
        %v1171 = vpop.permute.xlu0 %1170
        %1172 = vrot.lane.b32.xlu0 %v895, 112
        %v1173 = vpop.permute.xlu0 %1172
        %v1174 = vsel %vm900, %v1171, 0
        %v1176 = vsel %vm900, %v1173, 0
        %1178 = vmatpush.xpose.msra.mxu0 0.0
        %1179 = vmatpush.xpose.msra.mxu0 0.0
        %1180 = vmatpush.xpose.msra.mxu0 0.0
        %1181 = vmatpush.xpose.msra.mxu0 0.0
        %1182 = vmatpush.xpose.msra.mxu0 0.0
        %1183 = vmatpush.xpose.msra.mxu0 0.0
        %1184 = vmatpush.xpose.msra.mxu0 0.0
        %1185 = vmatpush.xpose.msra.mxu0 0.0
        %1186 = vmatpush.xpose.msra.mxu0 0.0
        %1187 = vmatpush.xpose.msra.mxu0 0.0
        %1188 = vmatpush.xpose.msra.mxu0 0.0
        %1189 = vmatpush.xpose.msra.mxu0 0.0
        %1190 = vmatpush.xpose.msra.mxu0 0.0
        %1191 = vmatpush.xpose.msra.mxu0 0.0
        %1192 = vmatpush.xpose.msra.mxu0 0.0
        %1193 = vmatpush.xpose.msra.mxu0 %v1176
        %1194 = vmatmul.f32.gmra.mxu0 %v1174
        %v1195 = vpop.f32.mrf.mxu0
        %v1196 = vadd.f32 0.0, %v1195
        %1197 = vdwg.mxu0
        %1198 = vrot.lane.b32.xlu0 %v861, 112
        %v1199 = vpop.permute.xlu0 %1198
        %1200 = vrot.lane.b32.xlu0 %v898, 112
        %v1201 = vpop.permute.xlu0 %1200
        %v1202 = vsel %vm900, %v1199, 0
        %v1204 = vsel %vm900, %v1201, 0
        %1206 = vmatpush.xpose.msra.mxu0 0.0
        %1207 = vmatpush.xpose.msra.mxu0 0.0
        %1208 = vmatpush.xpose.msra.mxu0 0.0
        %1209 = vmatpush.xpose.msra.mxu0 0.0
        %1210 = vmatpush.xpose.msra.mxu0 0.0
        %1211 = vmatpush.xpose.msra.mxu0 0.0
        %1212 = vmatpush.xpose.msra.mxu0 0.0
        %1213 = vmatpush.xpose.msra.mxu0 0.0
        %1214 = vmatpush.xpose.msra.mxu0 0.0
        %1215 = vmatpush.xpose.msra.mxu0 0.0
        %1216 = vmatpush.xpose.msra.mxu0 0.0
        %1217 = vmatpush.xpose.msra.mxu0 0.0
        %1218 = vmatpush.xpose.msra.mxu0 0.0
        %1219 = vmatpush.xpose.msra.mxu0 0.0
        %1220 = vmatpush.xpose.msra.mxu0 0.0
        %1221 = vmatpush.xpose.msra.mxu0 %v1204
        %1222 = vmatmul.f32.gmra.mxu0 %v1202
        %v1223 = vpop.f32.mrf.mxu0
        %v1224 = vadd.f32 0.0, %v1223
        %1225 = vdwg.mxu0
        %v1226 = vsel %vm900, %v1196, -inf
        %1227 = vmax.xlane.f32.xlu0 %v1226
        %v1228 = vpop.xlane.xlu0 %1227
        %v1229 = vsel %vm900, %v1224, -inf
        %1230 = vmax.xlane.f32.xlu0 %v1229
        %v1231 = vpop.xlane.xlu0 %1230
        %v1232 = vsub.f32 %v1196, %v1228
        %v1233 = vsub.f32 %v1224, %v1231
        %v1234 = vmul.f32 %v1232, 1.442695
        %v1235 = vpow.pop %v1234
        %v1236 = vmul.f32 %v1233, 1.442695
        %v1237 = vpow.pop %v1236
        %v1238 = vsel %vm900, %v1235, 0.0
        %1239 = vadd.xlane.f32.xlu0 %v1238
        %v1240 = vpop.xlane.xlu0 %1239
        %v1241 = vsel %vm900, %v1237, 0.0
        %1242 = vadd.xlane.f32.xlu0 %v1241
        %v1243 = vpop.xlane.xlu0 %1242
        %v1244 = vrcp.pop %v1240
        %v1245 = vrcp.pop %v1243
        %v1246 = vmul.f32 %v1235, %v1244
        %v1247 = vmul.f32 %v1237, %v1245
        %1248 = vrot.lane.b32.xlu0 %v895, 80
        %v1249 = vpop.permute.xlu0 %1248
        %v1252 = vsel %vm900, %v1246, 0
        %1254 = vmatpush.msra.mxu0 0.0
        %1255 = vmatpush.msra.mxu0 0.0
        %1256 = vmatpush.msra.mxu0 0.0
        %1257 = vmatpush.msra.mxu0 0.0
        %1258 = vmatpush.msra.mxu0 0.0
        %1259 = vmatpush.msra.mxu0 0.0
        %1260 = vmatpush.msra.mxu0 0.0
        %1261 = vmatpush.msra.mxu0 0.0
        %1262 = vmatpush.msra.mxu0 0.0
        %1263 = vmatpush.msra.mxu0 0.0
        %1264 = vmatpush.msra.mxu0 0.0
        %1265 = vmatpush.msra.mxu0 0.0
        %1266 = vmatpush.msra.mxu0 0.0
        %1267 = vmatpush.msra.mxu0 0.0
        %1268 = vmatpush.msra.mxu0 0.0
        %1269 = vmatpush.msra.mxu0 %v1249
        %1270 = vmatmul.f32.gmra.mxu0 %v1252
        %v1271 = vpop.f32.mrf.mxu0
        %v1272 = vadd.f32 0.0, %v1271
        %1273 = vdwg.mxu0
        %1274 = vrot.lane.b32.xlu0 %v898, 80
        %v1275 = vpop.permute.xlu0 %1274
        %v1278 = vsel %vm900, %v1247, 0
        %1280 = vmatpush.msra.mxu0 0.0
        %1281 = vmatpush.msra.mxu0 0.0
        %1282 = vmatpush.msra.mxu0 0.0
        %1283 = vmatpush.msra.mxu0 0.0
        %1284 = vmatpush.msra.mxu0 0.0
        %1285 = vmatpush.msra.mxu0 0.0
        %1286 = vmatpush.msra.mxu0 0.0
        %1287 = vmatpush.msra.mxu0 0.0
        %1288 = vmatpush.msra.mxu0 0.0
        %1289 = vmatpush.msra.mxu0 0.0
        %1290 = vmatpush.msra.mxu0 0.0
        %1291 = vmatpush.msra.mxu0 0.0
        %1292 = vmatpush.msra.mxu0 0.0
        %1293 = vmatpush.msra.mxu0 0.0
        %1294 = vmatpush.msra.mxu0 0.0
        %1295 = vmatpush.msra.mxu0 %v1275
        %1296 = vmatmul.f32.gmra.mxu0 %v1278
        %v1297 = vpop.f32.mrf.mxu0
        %v1298 = vadd.f32 0.0, %v1297
        %1299 = vdwg.mxu0
        %1302 = vrot.lane.b32.xlu0 %v1272, 16
        %v1303 = vpop.permute.xlu0 %1302
        %1304 = vrot.lane.b32.xlu0 %v1298, 16
        %v1305 = vpop.permute.xlu0 %1304
        %vm1308 = vcmask 195712
        %1309 = vst.msk [vmem:[#allocation4] sm:$0xff] %vm1308, %v1303
        %1310 = vst.msk [vmem:[#allocation4 + $0x8] sm:$0xff] %vm1308, %v1305
        %1311 = vrot.lane.b32.xlu0 %v858, 104
        %v1312 = vpop.permute.xlu0 %1311
        %1313 = vrot.lane.b32.xlu0 %v895, 104
        %v1314 = vpop.permute.xlu0 %1313
        %v1315 = vsel %vm900, %v1312, 0
        %v1317 = vsel %vm900, %v1314, 0
        %1319 = vmatpush.xpose.msra.mxu0 0.0
        %1320 = vmatpush.xpose.msra.mxu0 0.0
        %1321 = vmatpush.xpose.msra.mxu0 0.0
        %1322 = vmatpush.xpose.msra.mxu0 0.0
        %1323 = vmatpush.xpose.msra.mxu0 0.0
        %1324 = vmatpush.xpose.msra.mxu0 0.0
        %1325 = vmatpush.xpose.msra.mxu0 0.0
        %1326 = vmatpush.xpose.msra.mxu0 0.0
        %1327 = vmatpush.xpose.msra.mxu0 0.0
        %1328 = vmatpush.xpose.msra.mxu0 0.0
        %1329 = vmatpush.xpose.msra.mxu0 0.0
        %1330 = vmatpush.xpose.msra.mxu0 0.0
        %1331 = vmatpush.xpose.msra.mxu0 0.0
        %1332 = vmatpush.xpose.msra.mxu0 0.0
        %1333 = vmatpush.xpose.msra.mxu0 0.0
        %1334 = vmatpush.xpose.msra.mxu0 %v1317
        %1335 = vmatmul.f32.gmra.mxu0 %v1315
        %v1336 = vpop.f32.mrf.mxu0
        %v1337 = vadd.f32 0.0, %v1336
        %1338 = vdwg.mxu0
        %1339 = vrot.lane.b32.xlu0 %v861, 104
        %v1340 = vpop.permute.xlu0 %1339
        %1341 = vrot.lane.b32.xlu0 %v898, 104
        %v1342 = vpop.permute.xlu0 %1341
        %v1343 = vsel %vm900, %v1340, 0
        %v1345 = vsel %vm900, %v1342, 0
        %1347 = vmatpush.xpose.msra.mxu0 0.0
        %1348 = vmatpush.xpose.msra.mxu0 0.0
        %1349 = vmatpush.xpose.msra.mxu0 0.0
        %1350 = vmatpush.xpose.msra.mxu0 0.0
        %1351 = vmatpush.xpose.msra.mxu0 0.0
        %1352 = vmatpush.xpose.msra.mxu0 0.0
        %1353 = vmatpush.xpose.msra.mxu0 0.0
        %1354 = vmatpush.xpose.msra.mxu0 0.0
        %1355 = vmatpush.xpose.msra.mxu0 0.0
        %1356 = vmatpush.xpose.msra.mxu0 0.0
        %1357 = vmatpush.xpose.msra.mxu0 0.0
        %1358 = vmatpush.xpose.msra.mxu0 0.0
        %1359 = vmatpush.xpose.msra.mxu0 0.0
        %1360 = vmatpush.xpose.msra.mxu0 0.0
        %1361 = vmatpush.xpose.msra.mxu0 0.0
        %1362 = vmatpush.xpose.msra.mxu0 %v1345
        %1363 = vmatmul.f32.gmra.mxu0 %v1343
        %v1364 = vpop.f32.mrf.mxu0
        %v1365 = vadd.f32 0.0, %v1364
        %1366 = vdwg.mxu0
        %v1367 = vsel %vm900, %v1337, -inf
        %1368 = vmax.xlane.f32.xlu0 %v1367
        %v1369 = vpop.xlane.xlu0 %1368
        %v1370 = vsel %vm900, %v1365, -inf
        %1371 = vmax.xlane.f32.xlu0 %v1370
        %v1372 = vpop.xlane.xlu0 %1371
        %v1373 = vsub.f32 %v1337, %v1369
        %v1374 = vsub.f32 %v1365, %v1372
        %v1375 = vmul.f32 %v1373, 1.442695
        %v1376 = vpow.pop %v1375
        %v1377 = vmul.f32 %v1374, 1.442695
        %v1378 = vpow.pop %v1377
        %v1379 = vsel %vm900, %v1376, 0.0
        %1380 = vadd.xlane.f32.xlu0 %v1379
        %v1381 = vpop.xlane.xlu0 %1380
        %v1382 = vsel %vm900, %v1378, 0.0
        %1383 = vadd.xlane.f32.xlu0 %v1382
        %v1384 = vpop.xlane.xlu0 %1383
        %v1385 = vrcp.pop %v1381
        %v1386 = vrcp.pop %v1384
        %v1387 = vmul.f32 %v1376, %v1385
        %v1388 = vmul.f32 %v1378, %v1386
        %1389 = vrot.lane.b32.xlu0 %v895, 72
        %v1390 = vpop.permute.xlu0 %1389
        %v1393 = vsel %vm900, %v1387, 0
        %1395 = vmatpush.msra.mxu0 0.0
        %1396 = vmatpush.msra.mxu0 0.0
        %1397 = vmatpush.msra.mxu0 0.0
        %1398 = vmatpush.msra.mxu0 0.0
        %1399 = vmatpush.msra.mxu0 0.0
        %1400 = vmatpush.msra.mxu0 0.0
        %1401 = vmatpush.msra.mxu0 0.0
        %1402 = vmatpush.msra.mxu0 0.0
        %1403 = vmatpush.msra.mxu0 0.0
        %1404 = vmatpush.msra.mxu0 0.0
        %1405 = vmatpush.msra.mxu0 0.0
        %1406 = vmatpush.msra.mxu0 0.0
        %1407 = vmatpush.msra.mxu0 0.0
        %1408 = vmatpush.msra.mxu0 0.0
        %1409 = vmatpush.msra.mxu0 0.0
        %1410 = vmatpush.msra.mxu0 %v1390
        %1411 = vmatmul.f32.gmra.mxu0 %v1393
        %v1412 = vpop.f32.mrf.mxu0
        %v1413 = vadd.f32 0.0, %v1412
        %1414 = vdwg.mxu0
        %1415 = vrot.lane.b32.xlu0 %v898, 72
        %v1416 = vpop.permute.xlu0 %1415
        %v1419 = vsel %vm900, %v1388, 0
        %1421 = vmatpush.msra.mxu0 0.0
        %1422 = vmatpush.msra.mxu0 0.0
        %1423 = vmatpush.msra.mxu0 0.0
        %1424 = vmatpush.msra.mxu0 0.0
        %1425 = vmatpush.msra.mxu0 0.0
        %1426 = vmatpush.msra.mxu0 0.0
        %1427 = vmatpush.msra.mxu0 0.0
        %1428 = vmatpush.msra.mxu0 0.0
        %1429 = vmatpush.msra.mxu0 0.0
        %1430 = vmatpush.msra.mxu0 0.0
        %1431 = vmatpush.msra.mxu0 0.0
        %1432 = vmatpush.msra.mxu0 0.0
        %1433 = vmatpush.msra.mxu0 0.0
        %1434 = vmatpush.msra.mxu0 0.0
        %1435 = vmatpush.msra.mxu0 0.0
        %1436 = vmatpush.msra.mxu0 %v1416
        %1437 = vmatmul.f32.gmra.mxu0 %v1419
        %v1438 = vpop.f32.mrf.mxu0
        %v1439 = vadd.f32 0.0, %v1438
        %1440 = vdwg.mxu0
        %1443 = vrot.lane.b32.xlu0 %v1413, 24
        %v1444 = vpop.permute.xlu0 %1443
        %1445 = vrot.lane.b32.xlu0 %v1439, 24
        %v1446 = vpop.permute.xlu0 %1445
        %vm1449 = vcmask 261312
        %1450 = vst.msk [vmem:[#allocation4] sm:$0xff] %vm1449, %v1444
        %1451 = vst.msk [vmem:[#allocation4 + $0x8] sm:$0xff] %vm1449, %v1446
        %v1452 = vld [vmem:[#allocation4] sm:$0xff]
        %v1453 = vld [vmem:[#allocation4 + $0x8] sm:$0xff]
        %v1454 = vadd.f32 %v1452, %v821
        %v1455 = vadd.f32 %v1453, %v822
        %v1456 = vld [vmem:[%s676] sm:$0x1]
        %v1457 = vld [vmem:[%s797] sm:$0x1]
        %v1458 = vsel %vm833, %v1454, 0.0
        %1459 = vadd.xlane.f32.xlu0 %v1458
        %v1460 = vpop.xlane.xlu0 %1459
        %v1461 = vsel %vm833, %v1455, 0.0
        %1462 = vadd.xlane.f32.xlu0 %v1461
        %v1463 = vpop.xlane.xlu0 %1462
        %v1464 = vrcp.pop 32.0
        %v1465 = vmul.f32 32.0, %v1464
        %v1466 = vsub.f32 1.0, %v1465
        %v1467 = vmul.f32 %v1464, %v1466
        %v1468 = vadd.f32 %v1464, %v1467
        %vm1469 = vweird.f32 %v1464
        %v1470 = vsel %vm1469, %v1464, %v1468
        %v1471 = vmul.f32 %v1460, %v1470
        %v1472 = vmul.f32 %v1463, %v1470
        %v1473 = vsub.f32 %v1454, %v1471
        %v1474 = vsub.f32 %v1455, %v1472
        %v1475 = vmul.f32 %v1473, %v1473
        %v1476 = vmul.f32 %v1474, %v1474
        %v1477 = vsel %vm833, %v1475, 0.0
        %1478 = vadd.xlane.f32.xlu0 %v1477
        %v1479 = vpop.xlane.xlu0 %1478
        %v1480 = vsel %vm833, %v1476, 0.0
        %1481 = vadd.xlane.f32.xlu0 %v1480
        %v1482 = vpop.xlane.xlu0 %1481
        %v1483 = vmul.f32 %v1479, %v1470
        %v1484 = vmul.f32 %v1482, %v1470
        %v1485 = vadd.f32 %v1483, 1e-05
        %v1486 = vadd.f32 %v1484, 1e-05
        %v1487 = vrsqrt.pop %v1485
        %v1488 = vmul.f32 %v1487, %v1485
        %v1489 = vmul.f32 %v1488, %v1487
        %v1490 = vmul.f32 0.5, %v1489
        %v1491 = vsub.f32 1.5, %v1490
        %v1492 = vmul.f32 %v1487, %v1491
        %vm1493 = vweird.f32 %v1485
        %vm1494 = vweird.f32 %v1487
        %vm1495 = vmor %vm1493, %vm1494
        %v1496 = vsel %vm1495, %v1487, %v1492
        %v1497 = vrsqrt.pop %v1486
        %v1498 = vmul.f32 %v1497, %v1486
        %v1499 = vmul.f32 %v1498, %v1497
        %v1500 = vmul.f32 0.5, %v1499
        %v1501 = vsub.f32 1.5, %v1500
        %v1502 = vmul.f32 %v1497, %v1501
        %vm1503 = vweird.f32 %v1486
        %vm1504 = vweird.f32 %v1497
        %vm1505 = vmor %vm1503, %vm1504
        %v1506 = vsel %vm1505, %v1497, %v1502
        %v1507 = vmul.f32 %v1473, %v1496
        %v1508 = vmul.f32 %v1474, %v1506
        %v1510 = vperm.slane %v1456, 0
        %v1512 = vmul.f32 %v1507, %v1510
        %v1513 = vmul.f32 %v1508, %v1510
        %v1515 = vperm.slane %v1457, 0
        %v1517 = vadd.f32 %v1512, %v1515
        %v1518 = vadd.f32 %v1513, %v1515
        %v1519 = vld [vmem:[%s686] sm:$0xff]
        %v1520 = vld [vmem:[%s686 + $0x8] sm:$0xff]
        %v1521 = vld [vmem:[%s686 + $0x10] sm:$0xff]
        %v1522 = vld [vmem:[%s686 + $0x18] sm:$0xff]
        %v1523 = vld [vmem:[%s800] sm:$0x1]
        %v1525 = vperm.slane %v1523, 0
        %v1528 = vsel %vm833, %v1517, 0
        %v1531 = vsel %vm833, %v1518, 0
        %1533 = vmatpush.msra.mxu0 0.0
        %1534 = vmatpush.msra.mxu0 0.0
        %1535 = vmatpush.msra.mxu0 0.0
        %1536 = vmatpush.msra.mxu0 0.0
        %1537 = vmatpush.msra.mxu0 0.0
        %1538 = vmatpush.msra.mxu0 0.0
        %1539 = vmatpush.msra.mxu0 0.0
        %1540 = vmatpush.msra.mxu0 0.0
        %1541 = vmatpush.msra.mxu0 0.0
        %1542 = vmatpush.msra.mxu0 0.0
        %1543 = vmatpush.msra.mxu0 0.0
        %1544 = vmatpush.msra.mxu0 0.0
        %1545 = vmatpush.msra.mxu0 %v1522
        %1546 = vmatpush.msra.mxu0 %v1521
        %1547 = vmatpush.msra.mxu0 %v1520
        %1548 = vmatpush.msra.mxu0 %v1519
        %1549 = vmatmul.f32.gmra.mxu0 %v1528
        %v1550 = vpop.f32.mrf.mxu0
        %v1551 = vadd.f32 %v1525, %v1550
        %1552 = vmatmul.f32.gmra.mxu0 %v1531
        %v1553 = vpop.f32.mrf.mxu0
        %v1554 = vadd.f32 %v1525, %v1553
        %1555 = vdwg.mxu0
        %v1556 = vmax.f32 %v1551, 0.0
        %v1557 = vmax.f32 %v1554, 0.0
        %v1558 = vld [vmem:[%s696] sm:$0xff]
        %v1559 = vld [vmem:[%s696 + $0x8] sm:$0xff]
        %v1560 = vld [vmem:[%s696 + $0x10] sm:$0xff]
        %v1561 = vld [vmem:[%s696 + $0x18] sm:$0xff]
        %v1562 = vld [vmem:[%s803] sm:$0x1]
        %v1564 = vperm.slane %v1562, 0
        %v1567 = vsel %vm833, %v1556, 0
        %v1570 = vsel %vm833, %v1557, 0
        %1572 = vmatpush.msra.mxu0 0.0
        %1573 = vmatpush.msra.mxu0 0.0
        %1574 = vmatpush.msra.mxu0 0.0
        %1575 = vmatpush.msra.mxu0 0.0
        %1576 = vmatpush.msra.mxu0 0.0
        %1577 = vmatpush.msra.mxu0 0.0
        %1578 = vmatpush.msra.mxu0 0.0
        %1579 = vmatpush.msra.mxu0 0.0
        %1580 = vmatpush.msra.mxu0 0.0
        %1581 = vmatpush.msra.mxu0 0.0
        %1582 = vmatpush.msra.mxu0 0.0
        %1583 = vmatpush.msra.mxu0 0.0
        %1584 = vmatpush.msra.mxu0 %v1561
        %1585 = vmatpush.msra.mxu0 %v1560
        %1586 = vmatpush.msra.mxu0 %v1559
        %1587 = vmatpush.msra.mxu0 %v1558
        %1588 = vmatmul.f32.gmra.mxu0 %v1567
        %v1589 = vpop.f32.mrf.mxu0
        %v1590 = vadd.f32 %v1564, %v1589
        %1591 = vmatmul.f32.gmra.mxu0 %v1570
        %v1592 = vpop.f32.mrf.mxu0
        %v1593 = vadd.f32 %v1564, %v1592
        %1594 = vdwg.mxu0
        %v1595 = vadd.f32 %v1517, %v1590
        %v1596 = vadd.f32 %v1518, %v1593
        %v1597 = vld [vmem:[%s705] sm:$0x1]
        %v1598 = vld [vmem:[%s806] sm:$0x1]
        %v1599 = vsel %vm833, %v1595, 0.0
        %1600 = vadd.xlane.f32.xlu0 %v1599
        %v1601 = vpop.xlane.xlu0 %1600
        %v1602 = vsel %vm833, %v1596, 0.0
        %1603 = vadd.xlane.f32.xlu0 %v1602
        %v1604 = vpop.xlane.xlu0 %1603
        %v1605 = vmul.f32 %v1601, %v1470
        %v1606 = vmul.f32 %v1604, %v1470
        %v1607 = vsub.f32 %v1595, %v1605
        %v1608 = vsub.f32 %v1596, %v1606
        %v1609 = vmul.f32 %v1607, %v1607
        %v1610 = vmul.f32 %v1608, %v1608
        %v1611 = vsel %vm833, %v1609, 0.0
        %1612 = vadd.xlane.f32.xlu0 %v1611
        %v1613 = vpop.xlane.xlu0 %1612
        %v1614 = vsel %vm833, %v1610, 0.0
        %1615 = vadd.xlane.f32.xlu0 %v1614
        %v1616 = vpop.xlane.xlu0 %1615
        %v1617 = vmul.f32 %v1613, %v1470
        %v1618 = vmul.f32 %v1616, %v1470
        %v1619 = vadd.f32 %v1617, 1e-05
        %v1620 = vadd.f32 %v1618, 1e-05
        %v1621 = vrsqrt.pop %v1619
        %v1622 = vmul.f32 %v1621, %v1619
        %v1623 = vmul.f32 %v1622, %v1621
        %v1624 = vmul.f32 0.5, %v1623
        %v1625 = vsub.f32 1.5, %v1624
        %v1626 = vmul.f32 %v1621, %v1625
        %vm1627 = vweird.f32 %v1619
        %vm1628 = vweird.f32 %v1621
        %vm1629 = vmor %vm1627, %vm1628
        %v1630 = vsel %vm1629, %v1621, %v1626
        %v1631 = vrsqrt.pop %v1620
        %v1632 = vmul.f32 %v1631, %v1620
        %v1633 = vmul.f32 %v1632, %v1631
        %v1634 = vmul.f32 0.5, %v1633
        %v1635 = vsub.f32 1.5, %v1634
        %v1636 = vmul.f32 %v1631, %v1635
        %vm1637 = vweird.f32 %v1620
        %vm1638 = vweird.f32 %v1631
        %vm1639 = vmor %vm1637, %vm1638
        %v1640 = vsel %vm1639, %v1631, %v1636
        %v1641 = vmul.f32 %v1607, %v1630
        %v1642 = vmul.f32 %v1608, %v1640
        %v1644 = vperm.slane %v1597, 0
        %v1646 = vmul.f32 %v1641, %v1644
        %v1647 = vmul.f32 %v1642, %v1644
        %v1649 = vperm.slane %v1598, 0
        %v1651 = vadd.f32 %v1646, %v1649
        %v1652 = vadd.f32 %v1647, %v1649
        %1653 = vst.msk [vmem:[#allocation2] sm:$0xff] %vm833, %v1651
        %1654 = vst.msk [vmem:[#allocation2 + $0x8] sm:$0xff] %vm833, %v1652
        %p1655 = scmp.eq.s32.totalorder %s33, 1
        // Predicated region
        $region113: #{tpu_custom_call.1} parent=75 // pred_check
          %p1656 = pneg %p1655
        $region114: #{tpu_custom_call.1} parent=75 // pred_check_branch
          %1658 = sbr.rel (%p1656) target = $region116
        $region115: #{tpu_custom_call.1} parent=75 // pred_region
          %1659 = vst.msk [vmem:[#allocation16] sm:$0xff] %vm833, %v1651
          %1660 = vst.msk [vmem:[#allocation16 + $0x8] sm:$0xff] %vm833, %v1652
        $region116: #{tpu_custom_call.1} parent=75 // pred_fallthru
          _
        // Predicated region
        $region117: #{tpu_custom_call.1} parent=75 // pred_check
          %p1661 = pneg %p422
        $region118: #{tpu_custom_call.1} parent=75 // pred_check_branch
          %1663 = sbr.rel (%p1661) target = $region120
        $region119: #{tpu_custom_call.1} parent=75 // pred_region
          %s1664 = smul.u32 2, %s32
          %1666 = vsyncadd [#allocation7], 0
          %s1667 = smul.addr %s1664, 8
          %s1668 = scalar_lea.hbm %s14, %s1667
          %s1669 = sshll.u32 [#allocation16], 4
          %s1670 = int_to_ptr.vmem [resolvable:$true] %s1669
          %s1671 = sshll.u32 %s1668, 4
          %s1672 = int_to_ptr.hbm [resolvable:$true] %s1671
          %1677 = dma.vmem_to_hbm [thread:$0]  %s1670, 256, %s1672, [#allocation7], 128, 128, 8
        $region120: #{tpu_custom_call.1} parent=75 // pred_fallthru
          _
        // Predicated region
        $region121: #{tpu_custom_call.1} parent=75 // pred_check
          %p1678 = pneg %p422
        $region122: #{tpu_custom_call.1} parent=75 // pred_check_branch
          %1680 = sbr.rel (%p1678) target = $region124
        $region123: #{tpu_custom_call.1} parent=75 // pred_region
          %1682 = dma.done [#allocation7], 256
        $region124: #{tpu_custom_call.1} parent=75 // pred_fallthru
          _
      $region76: #{tpu_custom_call.1} parent=5 // pred_fallthru
        _
      %p1683 = scmp.le.s32.totalorder 2, %s23
      // Predicated region
      $region125: #{tpu_custom_call.1} parent=5 // pred_check
        %p1684 = pneg %p1683
      $region126: #{tpu_custom_call.1} parent=5 // pred_check_branch
        %1686 = sbr.rel (%p1684) target = $region128
      $region127: #{tpu_custom_call.1} parent=5 // pred_region
        %s1687 = ssub.s32 %s23, 2
      $region128: #{tpu_custom_call.1} parent=5 // pred_fallthru
        _
    $region6: #{tpu_custom_call.1} parent=1 // loop_footer
      %s27 = sadd.s32 1, %s23
    $region7: #{tpu_custom_call.1} parent=1 // loop_footer_branch
      %22 = sbr.rel target = $region3
    $region8: #{tpu_custom_call.1} parent=1 // loop_exit
      _
    %1688 = vsyncpa [#allocation6], 1
    %s1689 = scalar_lea.sflag [#allocation6], 1
    %1690 = vsyncpa %s1689, 1
    %1691 = vsyncpa [#allocation9], 1
    %1692 = vsyncpa [#allocation7], 1
    %s1693 = scalar_lea.sflag [#allocation7], 1
    %1694 = vsyncpa %s1693, 1

</llo_original>
